<compile_context>
chip_gen: v6e
topology: v6e:2x2x1
jax: 0.10.0
libtpu: 0.0.40
codegen_flags: <defaults>
</compile_context>

<pallas_src>
import jax
import jax.numpy as jnp
from jax.experimental import pallas as pl
from jax.experimental.pallas import tpu as pltpu


def _layernorm(x, gamma, beta, eps=1e-5):
    mu = jnp.mean(x, axis=-1, keepdims=True)
    xc = x - mu
    var = jnp.mean(xc * xc, axis=-1, keepdims=True)
    inv = jax.lax.rsqrt(var + eps)
    return xc * inv * gamma + beta


def transformer_kernel(x_ref, wemb_ref, bemb_ref,
                       wsa_ref, bsa_ref, g1_ref, be1_ref,
                       w1_ref, b1_ref, w2_ref, b2_ref,
                       g2_ref, be2_ref,
                       wout_ref, bout_ref,
                       o_ref, h_ref):
    l = pl.program_id(1)

    @pl.when(l == 0)
    def _():
        # embedding: [tb, Din] @ [Din, E]  (bf16 MXU inputs, f32 accumulation)
        h_ref[...] = jnp.dot(x_ref[...].astype(jnp.bfloat16), wemb_ref[...],
                             preferred_element_type=jnp.float32) + bemb_ref[...]

    h = h_ref[...]

    # --- self-attention block (seq_len == 1): fused out_proj(V_proj(h)) ---
    sa = jnp.dot(h.astype(jnp.bfloat16), wsa_ref[0],
                 preferred_element_type=jnp.float32) + bsa_ref[0]
    h = _layernorm(h + sa, g1_ref[0], be1_ref[0])

    # --- feed-forward block: linear1 -> relu -> linear2 ---
    f = jnp.dot(h.astype(jnp.bfloat16), w1_ref[0],
                preferred_element_type=jnp.float32) + b1_ref[0]
    f = jnp.maximum(f, 0.0)
    ff = jnp.dot(f.astype(jnp.bfloat16), w2_ref[0],
                 preferred_element_type=jnp.float32) + b2_ref[0]
    h = _layernorm(h + ff, g2_ref[0], be2_ref[0])

    h_ref[...] = h

    @pl.when(l == pl.num_programs(1) - 1)
    def _():
        # output projection: [tb, E] @ [E, Din]
        o_ref[...] = jnp.dot(h.astype(jnp.bfloat16), wout_ref[...],
                             preferred_element_type=jnp.float32) + bout_ref[...]


def transformer_forward(x, params, *, tb=None):
    (wemb, bemb, wsa, bsa, g1, be1,
     w1, b1, w2, b2, g2, be2, wout, bout) = params
    B, Din = x.shape
    E = wemb.shape[1]
    F = w1.shape[2]
    L = wsa.shape[0]

    if tb is None:
        # Fill MXU rows once B grows (multiple of 256 on v6e/v7x, 128 on v5e);
        # B//tb >= 2 also lets the "parallel" batch axis use both v7x cores.
        tb = B if B <= 256 else 256
    assert B % tb == 0, (B, tb)

    # Scoped-VMEM budget: streamed per-layer weights (double-buffered) +
    # resident embedding/output weights + activation tiles, plus headroom.
    wbytes = wemb.dtype.itemsize
    streamed = 2 * (E * E + E * F + F * E) * wbytes      # layer weights x 2 buffers
    resident = 2 * 2 * (Din * E) * wbytes                # wemb + wout (x 2 buffers)
    act = 4 * tb * Din * 4 + tb * E * 4                  # x/o tiles + h scratch
    vmem_limit = int(max(16 << 20,
                         min(64 << 20, 2 * (streamed + resident + act) + (8 << 20))))

    per_layer = lambda blk: pl.BlockSpec(blk, lambda b, l: (l, 0, 0))
    invariant = lambda blk: pl.BlockSpec(blk, lambda b, l, _n=len(blk): (0,) * _n)

    return pl.pallas_call(
        transformer_kernel,
        out_shape=jax.ShapeDtypeStruct((B, Din), jnp.float32),
        grid_spec=pltpu.PrefetchScalarGridSpec(
            num_scalar_prefetch=0,
            grid=(B // tb, L),                    # batch outermost, layer innermost
            in_specs=[
                pl.BlockSpec((tb, Din), lambda b, l: (b, 0)),   # x (tiled over batch)
                invariant((Din, E)), invariant((1, E)),         # embedding W, b
                per_layer((1, E, E)), per_layer((1, 1, E)),     # fused attn W_sa, b_sa
                per_layer((1, 1, E)), per_layer((1, 1, E)),     # norm1 gamma/beta
                per_layer((1, E, F)), per_layer((1, 1, F)),     # linear1 W, b
                per_layer((1, F, E)), per_layer((1, 1, E)),     # linear2 W, b
                per_layer((1, 1, E)), per_layer((1, 1, E)),     # norm2 gamma/beta
                invariant((E, Din)), invariant((1, Din)),       # output W, b
            ],
            out_specs=pl.BlockSpec((tb, Din), lambda b, l: (b, 0)),
            scratch_shapes=[pltpu.VMEM((tb, E), jnp.float32)],  # resident hidden state
        ),
        compiler_params=pltpu.CompilerParams(
            dimension_semantics=("parallel", "arbitrary"),
            vmem_limit_bytes=vmem_limit),
    )(x, wemb, bemb, wsa, bsa, g1, be1, w1, b1, w2, b2, g2, be2, wout, bout)


def init_params(key, input_dim, embed_dim, num_layers, dim_feedforward,
                weight_dtype=jnp.bfloat16):
    """Torch-style (uniform +-1/sqrt(fan_in)) init, packed for the kernel.

    Weight matrices are pre-transposed to [in, out] and stored in bf16;
    biases / LayerNorm params stay f32.  V-proj and out-proj are fused.
    """
    def lin(k, fan_in, fan_out):
        bound = 1.0 / float(fan_in) ** 0.5
        kw, kb = jax.random.split(k)
        w = jax.random.uniform(kw, (fan_out, fan_in), jnp.float32, -bound, bound)
        b = jax.random.uniform(kb, (fan_out,), jnp.float32, -bound, bound)
        return w, b  # torch layout [out, in]

    keys = jax.random.split(key, 2 + num_layers)
    E, F = embed_dim, dim_feedforward

    w_emb, b_emb = lin(keys[0], input_dim, E)
    w_out, b_out = lin(keys[1], E, input_dim)

    wsa_l, bsa_l, w1_l, b1_l, w2_l, b2_l = [], [], [], [], [], []
    for l in range(num_layers):
        lk = jax.random.split(keys[2 + l], 4)
        in_proj_w, in_proj_b = lin(lk[0], E, 3 * E)      # MHA in_proj [3E, E]
        wv, bv = in_proj_w[2 * E:], in_proj_b[2 * E:]    # only V matters (seq=1)
        wo, bo = lin(lk[1], E, E)                        # out_proj
        w1, b1 = lin(lk[2], E, F)
        w2, b2 = lin(lk[3], F, E)
        wv_t, wo_t = wv.T, wo.T                          # [in, out]
        wsa_l.append(wv_t @ wo_t)                        # fused attention weight
        bsa_l.append(bv[None, :] @ wo_t + bo[None, :])   # fused attention bias
        w1_l.append(w1.T); b1_l.append(b1[None, :])
        w2_l.append(w2.T); b2_l.append(b2[None, :])

    ones = jnp.ones((num_layers, 1, E), jnp.float32)
    zeros = jnp.zeros((num_layers, 1, E), jnp.float32)
    wd = weight_dtype

    return (w_emb.T.astype(wd), b_emb[None, :],
            jnp.stack(wsa_l).astype(wd), jnp.stack(bsa_l),
            ones, zeros,
            jnp.stack(w1_l).astype(wd), jnp.stack(b1_l),
            jnp.stack(w2_l).astype(wd), jnp.stack(b2_l),
            ones, zeros,
            w_out.T.astype(wd), b_out[None, :])


def reference_forward(x, params):
    """Pure-JAX f32 reference of the same math (weights upcast from bf16)."""
    (wemb, bemb, wsa, bsa, g1, be1,
     w1, b1, w2, b2, g2, be2, wout, bout) = params
    f32 = lambda a: a.astype(jnp.float32)
    h = x @ f32(wemb) + bemb
    for l in range(wsa.shape[0]):
        sa = h @ f32(wsa[l]) + bsa[l]
        h = _layernorm(h + sa, g1[l], be1[l])
        f = jnp.maximum(h @ f32(w1[l]) + b1[l], 0.0)
        ff = f @ f32(w2[l]) + b2[l]
        h = _layernorm(h + ff, g2[l], be2[l])
    return h @ f32(wout) + bout


if __name__ == "__main__":
    # Small, TPU-friendly shapes consistent with the module's forward().
    B = 8               # batch
    INPUT_DIM = 128     # module default is 128
    EMBED_DIM = 128     # scaled-down d_model
    NUM_HEADS = 4       # no effect on the math when seq_len == 1
    NUM_LAYERS = 2      # scaled-down num_layers
    DIM_FF = 256        # scaled-down dim_feedforward

    key = jax.random.PRNGKey(0)
    kp, kx = jax.random.split(key)
    params = init_params(kp, INPUT_DIM, EMBED_DIM, NUM_LAYERS, DIM_FF)
    x = jax.random.normal(kx, (B, INPUT_DIM), jnp.float32)

    y = transformer_forward(x, params)
    y = jax.block_until_ready(y)

    y_ref = reference_forward(x, params)
    assert y.shape == (B, INPUT_DIM)
    assert bool(jnp.all(jnp.isfinite(y)))
    assert bool(jnp.allclose(y, y_ref, atol=5e-2, rtol=5e-2)), \
        f"max abs diff {float(jnp.max(jnp.abs(y - y_ref)))}"

    print("KERNEL_OK")
</pallas_src>

<mosaic_0001>
module attributes {stable_mosaic.version = 11 : i64} {
  func.func @transformer_kernel(%arg0: i32, %arg1: i32, %arg2: memref<8x128xf32, #tpu.memory_space<vmem>>, %arg3: memref<128x128xbf16, #tpu.memory_space<vmem>>, %arg4: memref<1x128xf32, #tpu.memory_space<vmem>>, %arg5: memref<1x128x128xbf16, #tpu.memory_space<vmem>>, %arg6: memref<1x1x128xf32, #tpu.memory_space<vmem>>, %arg7: memref<1x1x128xf32, #tpu.memory_space<vmem>>, %arg8: memref<1x1x128xf32, #tpu.memory_space<vmem>>, %arg9: memref<1x128x256xbf16, #tpu.memory_space<vmem>>, %arg10: memref<1x1x256xf32, #tpu.memory_space<vmem>>, %arg11: memref<1x256x128xbf16, #tpu.memory_space<vmem>>, %arg12: memref<1x1x128xf32, #tpu.memory_space<vmem>>, %arg13: memref<1x1x128xf32, #tpu.memory_space<vmem>>, %arg14: memref<1x1x128xf32, #tpu.memory_space<vmem>>, %arg15: memref<128x128xbf16, #tpu.memory_space<vmem>>, %arg16: memref<1x128xf32, #tpu.memory_space<vmem>>, %arg17: memref<8x128xf32, #tpu.memory_space<vmem>>, %arg18: memref<8x128xf32, #tpu.memory_space<vmem>>) attributes {dimension_semantics = [#tpu.dimension_semantics<parallel>, #tpu.dimension_semantics<arbitrary>], iteration_bounds = array<i64: 1, 2>, scalar_prefetch = 0 : i64, scratch_operands = 1 : i64, tpu.core_type = #tpu.core_type<tc>, window_params = [{transform_indices = @transform_0, window_bounds = array<i64: 8, 128>}, {pipeline_mode = #tpu.pipeline_mode<synchronous>, transform_indices = @transform_1, window_bounds = array<i64: 128, 128>}, {pipeline_mode = #tpu.pipeline_mode<synchronous>, transform_indices = @transform_2, window_bounds = array<i64: 1, 128>}, {transform_indices = @transform_3, window_bounds = array<i64: 1, 128, 128>}, {transform_indices = @transform_4, window_bounds = array<i64: 1, 1, 128>}, {transform_indices = @transform_5, window_bounds = array<i64: 1, 1, 128>}, {transform_indices = @transform_6, window_bounds = array<i64: 1, 1, 128>}, {transform_indices = @transform_7, window_bounds = array<i64: 1, 128, 256>}, {transform_indices = @transform_8, window_bounds = array<i64: 1, 1, 256>}, {transform_indices = @transform_9, window_bounds = array<i64: 1, 256, 128>}, {transform_indices = @transform_10, window_bounds = array<i64: 1, 1, 128>}, {transform_indices = @transform_11, window_bounds = array<i64: 1, 1, 128>}, {transform_indices = @transform_12, window_bounds = array<i64: 1, 1, 128>}, {pipeline_mode = #tpu.pipeline_mode<synchronous>, transform_indices = @transform_13, window_bounds = array<i64: 128, 128>}, {pipeline_mode = #tpu.pipeline_mode<synchronous>, transform_indices = @transform_14, window_bounds = array<i64: 1, 128>}, {transform_indices = @transform_15, window_bounds = array<i64: 8, 128>}]} {
    %c0_i32 = arith.constant 0 : i32
    %0 = arith.cmpi eq, %arg1, %c0_i32 : i32
    %1 = arith.extui %0 : i1 to i32
    %c0_i32_0 = arith.constant 0 : i32
    %2 = arith.cmpi ne, %1, %c0_i32_0 : i32
    scf.if %2 {
      %c0_48 = arith.constant 0 : index
      %c0_49 = arith.constant 0 : index
      %84 = vector.load %arg2[%c0_48, %c0_49] : memref<8x128xf32, #tpu.memory_space<vmem>>, vector<8x128xf32>
      %85 = arith.truncf %84 : vector<8x128xf32> to vector<8x128xbf16>
      %c0_50 = arith.constant 0 : index
      %c0_51 = arith.constant 0 : index
      %86 = vector.load %arg3[%c0_50, %c0_51] : memref<128x128xbf16, #tpu.memory_space<vmem>>, vector<128x128xbf16>
      %cst_52 = arith.constant dense<0.000000e+00> : vector<8x128xf32>
      %87 = tpu.matmul %85, %86, %cst_52 {dimension_numbers = #tpu.dot_dimension_numbers<[1], [0], [0], [1], [0, 0, 1, 1], [], []>} : vector<8x128xbf16>, vector<128x128xbf16>, vector<8x128xf32> -> vector<8x128xf32>
      %c0_53 = arith.constant 0 : index
      %c0_54 = arith.constant 0 : index
      %88 = vector.load %arg4[%c0_53, %c0_54] : memref<1x128xf32, #tpu.memory_space<vmem>>, vector<1x128xf32>
      %89 = vector.broadcast %88 : vector<1x128xf32> to vector<8x128xf32>
      %90 = arith.addf %87, %89 : vector<8x128xf32>
      %c0_55 = arith.constant 0 : index
      %c0_56 = arith.constant 0 : index
      %91 = vector.load %arg18[%c0_55, %c0_56] : memref<8x128xf32, #tpu.memory_space<vmem>>, vector<8x128xf32>
      tpu.vector_store %arg18[%c0_55, %c0_56], %90 {strides = array<i32>} : memref<8x128xf32, #tpu.memory_space<vmem>>, vector<8x128xf32>,
    } else {
    }
    %c0 = arith.constant 0 : index
    %c0_1 = arith.constant 0 : index
    %3 = vector.load %arg18[%c0, %c0_1] : memref<8x128xf32, #tpu.memory_space<vmem>>, vector<8x128xf32>
    %4 = arith.truncf %3 : vector<8x128xf32> to vector<8x128xbf16>
    %c0_2 = arith.constant 0 : index
    %c0_3 = arith.constant 0 : index
    %c0_4 = arith.constant 0 : index
    %5 = vector.load %arg5[%c0_2, %c0_3, %c0_4] : memref<1x128x128xbf16, #tpu.memory_space<vmem>>, vector<1x128x128xbf16>
    %6 = vector.shape_cast %5 : vector<1x128x128xbf16> to vector<128x128xbf16>
    %cst = arith.constant dense<0.000000e+00> : vector<8x128xf32>
    %7 = tpu.matmul %4, %6, %cst {dimension_numbers = #tpu.dot_dimension_numbers<[1], [0], [0], [1], [0, 0, 1, 1], [], []>} : vector<8x128xbf16>, vector<128x128xbf16>, vector<8x128xf32> -> vector<8x128xf32>
    %c0_5 = arith.constant 0 : index
    %c0_6 = arith.constant 0 : index
    %c0_7 = arith.constant 0 : index
    %8 = vector.load %arg6[%c0_5, %c0_6, %c0_7] : memref<1x1x128xf32, #tpu.memory_space<vmem>>, vector<1x1x128xf32>
    %9 = vector.shape_cast %8 : vector<1x1x128xf32> to vector<1x128xf32>
    %10 = vector.broadcast %9 : vector<1x128xf32> to vector<8x128xf32>
    %11 = arith.addf %7, %10 : vector<8x128xf32>
    %12 = arith.addf %3, %11 : vector<8x128xf32>
    %c0_8 = arith.constant 0 : index
    %c0_9 = arith.constant 0 : index
    %c0_10 = arith.constant 0 : index
    %13 = vector.load %arg7[%c0_8, %c0_9, %c0_10] : memref<1x1x128xf32, #tpu.memory_space<vmem>>, vector<1x1x128xf32>
    %14 = vector.shape_cast %13 : vector<1x1x128xf32> to vector<1x128xf32>
    %c0_11 = arith.constant 0 : index
    %c0_12 = arith.constant 0 : index
    %c0_13 = arith.constant 0 : index
    %15 = vector.load %arg8[%c0_11, %c0_12, %c0_13] : memref<1x1x128xf32, #tpu.memory_space<vmem>>, vector<1x1x128xf32>
    %16 = vector.shape_cast %15 : vector<1x1x128xf32> to vector<1x128xf32>
    %cst_14 = arith.constant dense<0.000000e+00> : vector<8xf32>
    %17 = vector.multi_reduction <add>, %12, %cst_14 [1] : vector<8x128xf32> to vector<8xf32>
    %18 = vector.shape_cast %17 : vector<8xf32> to vector<8x1xf32>
    %cst_15 = arith.constant 1.280000e+02 : f32
    %19 = vector.broadcast %cst_15 : f32 to vector<8x1xf32>
    %20 = arith.divf %18, %19 : vector<8x1xf32>
    %21 = vector.broadcast %20 : vector<8x1xf32> to vector<8x128xf32>
    %22 = arith.subf %12, %21 : vector<8x128xf32>
    %23 = arith.mulf %22, %22 : vector<8x128xf32>
    %cst_16 = arith.constant dense<0.000000e+00> : vector<8xf32>
    %24 = vector.multi_reduction <add>, %23, %cst_16 [1] : vector<8x128xf32> to vector<8xf32>
    %25 = vector.shape_cast %24 : vector<8xf32> to vector<8x1xf32>
    %cst_17 = arith.constant 1.280000e+02 : f32
    %26 = vector.broadcast %cst_17 : f32 to vector<8x1xf32>
    %27 = arith.divf %25, %26 : vector<8x1xf32>
    %cst_18 = arith.constant 9.99999974E-6 : f32
    %28 = vector.broadcast %cst_18 : f32 to vector<8x1xf32>
    %29 = arith.addf %27, %28 : vector<8x1xf32>
    %30 = math.rsqrt %29 : vector<8x1xf32>
    %31 = vector.broadcast %30 : vector<8x1xf32> to vector<8x128xf32>
    %32 = arith.mulf %22, %31 : vector<8x128xf32>
    %33 = vector.broadcast %14 : vector<1x128xf32> to vector<8x128xf32>
    %34 = arith.mulf %32, %33 : vector<8x128xf32>
    %35 = vector.broadcast %16 : vector<1x128xf32> to vector<8x128xf32>
    %36 = arith.addf %34, %35 : vector<8x128xf32>
    %37 = arith.truncf %36 : vector<8x128xf32> to vector<8x128xbf16>
    %c0_19 = arith.constant 0 : index
    %c0_20 = arith.constant 0 : index
    %c0_21 = arith.constant 0 : index
    %38 = vector.load %arg9[%c0_19, %c0_20, %c0_21] : memref<1x128x256xbf16, #tpu.memory_space<vmem>>, vector<1x128x256xbf16>
    %39 = vector.shape_cast %38 : vector<1x128x256xbf16> to vector<128x256xbf16>
    %cst_22 = arith.constant dense<0.000000e+00> : vector<8x256xf32>
    %40 = tpu.matmul %37, %39, %cst_22 {dimension_numbers = #tpu.dot_dimension_numbers<[1], [0], [0], [1], [0, 0, 1, 1], [], []>} : vector<8x128xbf16>, vector<128x256xbf16>, vector<8x256xf32> -> vector<8x256xf32>
    %c0_23 = arith.constant 0 : index
    %c0_24 = arith.constant 0 : index
    %c0_25 = arith.constant 0 : index
    %41 = vector.load %arg10[%c0_23, %c0_24, %c0_25] : memref<1x1x256xf32, #tpu.memory_space<vmem>>, vector<1x1x256xf32>
    %42 = vector.shape_cast %41 : vector<1x1x256xf32> to vector<1x256xf32>
    %43 = vector.broadcast %42 : vector<1x256xf32> to vector<8x256xf32>
    %44 = arith.addf %40, %43 : vector<8x256xf32>
    %cst_26 = arith.constant 0.000000e+00 : f32
    %45 = vector.broadcast %cst_26 : f32 to vector<8x256xf32>
    %46 = arith.maximumf %44, %45 : vector<8x256xf32>
    %47 = arith.truncf %46 : vector<8x256xf32> to vector<8x256xbf16>
    %c0_27 = arith.constant 0 : index
    %c0_28 = arith.constant 0 : index
    %c0_29 = arith.constant 0 : index
    %48 = vector.load %arg11[%c0_27, %c0_28, %c0_29] : memref<1x256x128xbf16, #tpu.memory_space<vmem>>, vector<1x256x128xbf16>
    %49 = vector.shape_cast %48 : vector<1x256x128xbf16> to vector<256x128xbf16>
    %cst_30 = arith.constant dense<0.000000e+00> : vector<8x128xf32>
    %50 = tpu.matmul %47, %49, %cst_30 {dimension_numbers = #tpu.dot_dimension_numbers<[1], [0], [0], [1], [0, 0, 1, 1], [], []>} : vector<8x256xbf16>, vector<256x128xbf16>, vector<8x128xf32> -> vector<8x128xf32>
    %c0_31 = arith.constant 0 : index
    %c0_32 = arith.constant 0 : index
    %c0_33 = arith.constant 0 : index
    %51 = vector.load %arg12[%c0_31, %c0_32, %c0_33] : memref<1x1x128xf32, #tpu.memory_space<vmem>>, vector<1x1x128xf32>
    %52 = vector.shape_cast %51 : vector<1x1x128xf32> to vector<1x128xf32>
    %53 = vector.broadcast %52 : vector<1x128xf32> to vector<8x128xf32>
    %54 = arith.addf %50, %53 : vector<8x128xf32>
    %55 = arith.addf %36, %54 : vector<8x128xf32>
    %c0_34 = arith.constant 0 : index
    %c0_35 = arith.constant 0 : index
    %c0_36 = arith.constant 0 : index
    %56 = vector.load %arg13[%c0_34, %c0_35, %c0_36] : memref<1x1x128xf32, #tpu.memory_space<vmem>>, vector<1x1x128xf32>
    %57 = vector.shape_cast %56 : vector<1x1x128xf32> to vector<1x128xf32>
    %c0_37 = arith.constant 0 : index
    %c0_38 = arith.constant 0 : index
    %c0_39 = arith.constant 0 : index
    %58 = vector.load %arg14[%c0_37, %c0_38, %c0_39] : memref<1x1x128xf32, #tpu.memory_space<vmem>>, vector<1x1x128xf32>
    %59 = vector.shape_cast %58 : vector<1x1x128xf32> to vector<1x128xf32>
    %cst_40 = arith.constant dense<0.000000e+00> : vector<8xf32>
    %60 = vector.multi_reduction <add>, %55, %cst_40 [1] : vector<8x128xf32> to vector<8xf32>
    %61 = vector.shape_cast %60 : vector<8xf32> to vector<8x1xf32>
    %cst_41 = arith.constant 1.280000e+02 : f32
    %62 = vector.broadcast %cst_41 : f32 to vector<8x1xf32>
    %63 = arith.divf %61, %62 : vector<8x1xf32>
    %64 = vector.broadcast %63 : vector<8x1xf32> to vector<8x128xf32>
    %65 = arith.subf %55, %64 : vector<8x128xf32>
    %66 = arith.mulf %65, %65 : vector<8x128xf32>
    %cst_42 = arith.constant dense<0.000000e+00> : vector<8xf32>
    %67 = vector.multi_reduction <add>, %66, %cst_42 [1] : vector<8x128xf32> to vector<8xf32>
    %68 = vector.shape_cast %67 : vector<8xf32> to vector<8x1xf32>
    %cst_43 = arith.constant 1.280000e+02 : f32
    %69 = vector.broadcast %cst_43 : f32 to vector<8x1xf32>
    %70 = arith.divf %68, %69 : vector<8x1xf32>
    %cst_44 = arith.constant 9.99999974E-6 : f32
    %71 = vector.broadcast %cst_44 : f32 to vector<8x1xf32>
    %72 = arith.addf %70, %71 : vector<8x1xf32>
    %73 = math.rsqrt %72 : vector<8x1xf32>
    %74 = vector.broadcast %73 : vector<8x1xf32> to vector<8x128xf32>
    %75 = arith.mulf %65, %74 : vector<8x128xf32>
    %76 = vector.broadcast %57 : vector<1x128xf32> to vector<8x128xf32>
    %77 = arith.mulf %75, %76 : vector<8x128xf32>
    %78 = vector.broadcast %59 : vector<1x128xf32> to vector<8x128xf32>
    %79 = arith.addf %77, %78 : vector<8x128xf32>
    %c0_45 = arith.constant 0 : index
    %c0_46 = arith.constant 0 : index
    %80 = vector.load %arg18[%c0_45, %c0_46] : memref<8x128xf32, #tpu.memory_space<vmem>>, vector<8x128xf32>
    tpu.vector_store %arg18[%c0_45, %c0_46], %79 {strides = array<i32>} : memref<8x128xf32, #tpu.memory_space<vmem>>, vector<8x128xf32>,
    %c1_i32 = arith.constant 1 : i32
    %81 = arith.cmpi eq, %arg1, %c1_i32 : i32
    %82 = arith.extui %81 : i1 to i32
    %c0_i32_47 = arith.constant 0 : i32
    %83 = arith.cmpi ne, %82, %c0_i32_47 : i32
    scf.if %83 {
      %84 = arith.truncf %79 : vector<8x128xf32> to vector<8x128xbf16>
      %c0_48 = arith.constant 0 : index
      %c0_49 = arith.constant 0 : index
      %85 = vector.load %arg15[%c0_48, %c0_49] : memref<128x128xbf16, #tpu.memory_space<vmem>>, vector<128x128xbf16>
      %cst_50 = arith.constant dense<0.000000e+00> : vector<8x128xf32>
      %86 = tpu.matmul %84, %85, %cst_50 {dimension_numbers = #tpu.dot_dimension_numbers<[1], [0], [0], [1], [0, 0, 1, 1], [], []>} : vector<8x128xbf16>, vector<128x128xbf16>, vector<8x128xf32> -> vector<8x128xf32>
      %c0_51 = arith.constant 0 : index
      %c0_52 = arith.constant 0 : index
      %87 = vector.load %arg16[%c0_51, %c0_52] : memref<1x128xf32, #tpu.memory_space<vmem>>, vector<1x128xf32>
      %88 = vector.broadcast %87 : vector<1x128xf32> to vector<8x128xf32>
      %89 = arith.addf %86, %88 : vector<8x128xf32>
      %c0_53 = arith.constant 0 : index
      %c0_54 = arith.constant 0 : index
      %90 = vector.load %arg17[%c0_53, %c0_54] : memref<8x128xf32, #tpu.memory_space<vmem>>, vector<8x128xf32>
      tpu.vector_store %arg17[%c0_53, %c0_54], %89 {strides = array<i32>} : memref<8x128xf32, #tpu.memory_space<vmem>>, vector<8x128xf32>,
    } else {
    }
    return
  }
  func.func @transform_0(%arg0: i32, %arg1: i32) -> (i32, i32) {
    %c0_i32 = arith.constant 0 : i32
    %c0_i32_0 = arith.constant 0 : i32
    return %arg0, %c0_i32 : i32, i32
  }
  func.func @transform_1(%arg0: i32, %arg1: i32) -> (i32, i32) {
    %c0_i32 = arith.constant 0 : i32
    %c0_i32_0 = arith.constant 0 : i32
    %c0_i32_1 = arith.constant 0 : i32
    return %c0_i32, %c0_i32_0 : i32, i32
  }
  func.func @transform_2(%arg0: i32, %arg1: i32) -> (i32, i32) {
    %c0_i32 = arith.constant 0 : i32
    %c0_i32_0 = arith.constant 0 : i32
    %c0_i32_1 = arith.constant 0 : i32
    return %c0_i32, %c0_i32_0 : i32, i32
  }
  func.func @transform_3(%arg0: i32, %arg1: i32) -> (i32, i32, i32) {
    %c0_i32 = arith.constant 0 : i32
    %c0_i32_0 = arith.constant 0 : i32
    %c0_i32_1 = arith.constant 0 : i32
    return %arg1, %c0_i32, %c0_i32_0 : i32, i32, i32
  }
  func.func @transform_4(%arg0: i32, %arg1: i32) -> (i32, i32, i32) {
    %c0_i32 = arith.constant 0 : i32
    %c0_i32_0 = arith.constant 0 : i32
    %c0_i32_1 = arith.constant 0 : i32
    return %arg1, %c0_i32, %c0_i32_0 : i32, i32, i32
  }
  func.func @transform_5(%arg0: i32, %arg1: i32) -> (i32, i32, i32) {
    %c0_i32 = arith.constant 0 : i32
    %c0_i32_0 = arith.constant 0 : i32
    %c0_i32_1 = arith.constant 0 : i32
    return %arg1, %c0_i32, %c0_i32_0 : i32, i32, i32
  }
  func.func @transform_6(%arg0: i32, %arg1: i32) -> (i32, i32, i32) {
    %c0_i32 = arith.constant 0 : i32
    %c0_i32_0 = arith.constant 0 : i32
    %c0_i32_1 = arith.constant 0 : i32
    return %arg1, %c0_i32, %c0_i32_0 : i32, i32, i32
  }
  func.func @transform_7(%arg0: i32, %arg1: i32) -> (i32, i32, i32) {
    %c0_i32 = arith.constant 0 : i32
    %c0_i32_0 = arith.constant 0 : i32
    %c0_i32_1 = arith.constant 0 : i32
    return %arg1, %c0_i32, %c0_i32_0 : i32, i32, i32
  }
  func.func @transform_8(%arg0: i32, %arg1: i32) -> (i32, i32, i32) {
    %c0_i32 = arith.constant 0 : i32
    %c0_i32_0 = arith.constant 0 : i32
    %c0_i32_1 = arith.constant 0 : i32
    return %arg1, %c0_i32, %c0_i32_0 : i32, i32, i32
  }
  func.func @transform_9(%arg0: i32, %arg1: i32) -> (i32, i32, i32) {
    %c0_i32 = arith.constant 0 : i32
    %c0_i32_0 = arith.constant 0 : i32
    %c0_i32_1 = arith.constant 0 : i32
    return %arg1, %c0_i32, %c0_i32_0 : i32, i32, i32
  }
  func.func @transform_10(%arg0: i32, %arg1: i32) -> (i32, i32, i32) {
    %c0_i32 = arith.constant 0 : i32
    %c0_i32_0 = arith.constant 0 : i32
    %c0_i32_1 = arith.constant 0 : i32
    return %arg1, %c0_i32, %c0_i32_0 : i32, i32, i32
  }
  func.func @transform_11(%arg0: i32, %arg1: i32) -> (i32, i32, i32) {
    %c0_i32 = arith.constant 0 : i32
    %c0_i32_0 = arith.constant 0 : i32
    %c0_i32_1 = arith.constant 0 : i32
    return %arg1, %c0_i32, %c0_i32_0 : i32, i32, i32
  }
  func.func @transform_12(%arg0: i32, %arg1: i32) -> (i32, i32, i32) {
    %c0_i32 = arith.constant 0 : i32
    %c0_i32_0 = arith.constant 0 : i32
    %c0_i32_1 = arith.constant 0 : i32
    return %arg1, %c0_i32, %c0_i32_0 : i32, i32, i32
  }
  func.func @transform_13(%arg0: i32, %arg1: i32) -> (i32, i32) {
    %c0_i32 = arith.constant 0 : i32
    %c0_i32_0 = arith.constant 0 : i32
    %c0_i32_1 = arith.constant 0 : i32
    return %c0_i32, %c0_i32_0 : i32, i32
  }
  func.func @transform_14(%arg0: i32, %arg1: i32) -> (i32, i32) {
    %c0_i32 = arith.constant 0 : i32
    %c0_i32_0 = arith.constant 0 : i32
    %c0_i32_1 = arith.constant 0 : i32
    return %c0_i32, %c0_i32_0 : i32, i32
  }
  func.func @transform_15(%arg0: i32, %arg1: i32) -> (i32, i32) {
    %c0_i32 = arith.constant 0 : i32
    %c0_i32_0 = arith.constant 0 : i32
    return %arg0, %c0_i32 : i32, i32
  }
}

</mosaic_0001>

<llo_original>
// kernel: tpu_custom_call.1
$region0: #{tpu_custom_call.1}
  #allocation0 [shape = 'u32[]', space=smem, size = 0x4, offset = 0x4, fixed_abs, tag = 'smem constant byte address 0x4 - core index']
  #allocation1 [shape = 'u32[144,128]{1,0:T(1,128)}', space=vmem, size = 0x12000, scoped, tag = 'internal scratch']
  #allocation2 [shape = 'f32[8,128]{1,0:T(8,128)}', space=vmem, size = 0x1000, scoped, tag = 'scratch operand']
  %s0 = inlined_call_operand.hbm [shape: f32[8,128], index: 0, kind: input, shape index: {}]
  %s1 = inlined_call_operand.hbm [shape: bf16[128,128], index: 1, kind: input, shape index: {}]
  %s2 = inlined_call_operand.hbm [shape: f32[1,128], index: 2, kind: input, shape index: {}]
  %s3 = inlined_call_operand.hbm [shape: bf16[2,128,128], index: 3, kind: input, shape index: {}]
  %s4 = inlined_call_operand.vmem [shape: f32[2,1,128], index: 4, kind: input, shape index: {}]
  %s5 = inlined_call_operand.vmem [shape: f32[2,1,128], index: 5, kind: input, shape index: {}]
  %s6 = inlined_call_operand.vmem [shape: f32[2,1,128], index: 6, kind: input, shape index: {}]
  %s7 = inlined_call_operand.hbm [shape: bf16[2,128,256], index: 7, kind: input, shape index: {}]
  %s8 = inlined_call_operand.vmem [shape: f32[2,1,256], index: 8, kind: input, shape index: {}]
  %s9 = inlined_call_operand.hbm [shape: bf16[2,256,128], index: 9, kind: input, shape index: {}]
  %s10 = inlined_call_operand.vmem [shape: f32[2,1,128], index: 10, kind: input, shape index: {}]
  %s11 = inlined_call_operand.vmem [shape: f32[2,1,128], index: 11, kind: input, shape index: {}]
  %s12 = inlined_call_operand.vmem [shape: f32[2,1,128], index: 12, kind: input, shape index: {}]
  %s13 = inlined_call_operand.hbm [shape: bf16[128,128], index: 13, kind: input, shape index: {}]
  %s14 = inlined_call_operand.vmem [shape: f32[1,128], index: 14, kind: input, shape index: {}]
  %s15 = inlined_call_operand.hbm [shape: f32[8,128], index: 15, kind: output, shape index: {}]
  %s16 = sld [smem:[#allocation0]]
  $region129: #{tpu_custom_call.1} parent=0
    _
  %s18 = ssub.s32 1, %s16
  %s19 = scalar_select 0, %s18, %s16
  $region1: #{tpu_custom_call.1} parent=0
    #allocation3 [shape = 'u8[4096]{0}', space=vmem, size = 0x1000, scoped, tag = 'input window, operand 0, single buffered']
    #allocation4 [shape = 's32[2]{0}', space=sflag, size = 0x8, scoped, tag = 'scoped memory for tpu_custom_call.1']
    #allocation5 [shape = 's32[2]{0}', space=sflag, size = 0x8, scoped, tag = 'scoped memory for tpu_custom_call.1']
    #allocation6 [shape = 'u8[32768]{0}', space=vmem, size = 0x8000, scoped, tag = 'input window, operand 1, single buffered']
    #allocation7 [shape = 's32[1]{0}', space=sflag, size = 0x4, scoped, tag = 'scoped memory for tpu_custom_call.1']
    #allocation8 [shape = 'u8[512]{0}', space=vmem, size = 0x400, scoped, tag = 'input window, operand 2, single buffered']
    #allocation9 [shape = 'u8[65536]{0}', space=vmem, size = 0x10000, scoped, tag = 'input window, operand 3']
    #allocation10 [shape = 's32[2]{0}', space=sflag, size = 0x8, scoped, tag = 'scoped memory for tpu_custom_call.1']
    #allocation11 [shape = 'u8[131072]{0}', space=vmem, size = 0x20000, scoped, tag = 'input window, operand 7']
    #allocation12 [shape = 'u8[131072]{0}', space=vmem, size = 0x20000, scoped, tag = 'input window, operand 9']
    #allocation13 [shape = 's32[2]{0}', space=sflag, size = 0x8, scoped, tag = 'scoped memory for tpu_custom_call.1']
    #allocation14 [shape = 'u8[32768]{0}', space=vmem, size = 0x8000, scoped, tag = 'input window, operand 13, single buffered']
    #allocation15 [shape = 'u8[4096]{0}', space=vmem, size = 0x1000, scoped, tag = 'output window, operand 0, single buffered']
    %20 = vsyncpa [#allocation4], 0
    %21 = vsyncpa [#allocation7], 0
    %22 = vsyncpa [#allocation10], 0
    %s23 = scalar_lea.sflag [#allocation10], 1
    %24 = vsyncpa %s23, 0
    %25 = vsyncpa [#allocation13], 0
    %s26 = scalar_lea.sflag [#allocation13], 1
    %27 = vsyncpa %s26, 0
    %28 = vsyncpa [#allocation5], 0
    loop: start=0, step=1, limit=4
    $region2: #{tpu_custom_call.1} parent=1 // loop_pre_header
      _
    $region3: #{tpu_custom_call.1} parent=1 // loop_header
      %s30 = sphi 0, %s34
      %p31 = scmp.ge.s32.totalorder %s30, 4
      %s37 = sphi 0, %s49
      %s38 = sphi 0, %s45
      %s39 = sphi 0, %s37
      %s40 = sphi 0, %s38
      %s41 = sphi 0, %s39
      %s42 = sphi 0, %s40
      %s52 = sphi 0, %s54
      %s55 = sphi 0, %s52
      %s56 = sphi 0, %s55
      %s72 = sphi 0, %s56
      %s76 = sphi 0, %s76
      %s78 = sphi 0, %s76
      %s79 = sphi 0, %s78
      %s93 = sphi 0, %s79
      %s97 = sphi 0, %s97
      %s99 = sphi 0, %s97
      %s100 = sphi 0, %s99
      %s114 = sphi 0, %s100
      %s120 = sphi 0, %s122
      %s123 = sphi 0, %s120
      %s124 = sphi 0, %s123
      %s140 = sphi 0, %s124
      %s146 = sphi 0, %s148
      %s149 = sphi 0, %s146
      %s150 = sphi 0, %s149
      %s166 = sphi 0, %s150
      %s172 = sphi 0, %s174
      %s175 = sphi 0, %s172
      %s176 = sphi 0, %s175
      %s192 = sphi 0, %s176
      %s198 = sphi 0, %s200
      %s201 = sphi 0, %s198
      %s202 = sphi 0, %s201
      %s218 = sphi 0, %s202
      %s224 = sphi 0, %s226
      %s227 = sphi 0, %s224
      %s228 = sphi 0, %s227
      %s244 = sphi 0, %s228
      %s250 = sphi 0, %s252
      %s253 = sphi 0, %s250
      %s254 = sphi 0, %s253
      %s270 = sphi 0, %s254
      %s276 = sphi 0, %s278
      %s279 = sphi 0, %s276
      %s280 = sphi 0, %s279
      %s296 = sphi 0, %s280
      %s302 = sphi 0, %s304
      %s305 = sphi 0, %s302
      %s306 = sphi 0, %s305
      %s322 = sphi 0, %s306
      %s328 = sphi 0, %s330
      %s331 = sphi 0, %s328
      %s332 = sphi 0, %s331
      %s348 = sphi 0, %s332
      %s354 = sphi 0, %s356
      %s357 = sphi 0, %s354
      %s358 = sphi 0, %s357
      %s374 = sphi 0, %s358
      %s378 = sphi 0, %s378
      %s380 = sphi 0, %s378
      %s381 = sphi 0, %s380
      %s395 = sphi 0, %s381
      %s399 = sphi 0, %s399
      %s401 = sphi 0, %s399
      %s402 = sphi 0, %s401
      %s416 = sphi 0, %s402
      %s422 = sphi 0, %s424
      %s425 = sphi 0, %s422
      %s426 = sphi 0, %s425
      %s442 = sphi 0, %s426
    $region4: #{tpu_custom_call.1} parent=1 // loop_header_branch
      %33 = sbr.rel (%p31) target = $region8
    $region5: #{tpu_custom_call.1} parent=1 // loop_body
      %s35 = ssub.s32 %s30, 1
      %s36 = ssub.s32 %s30, 2
      %s43 = sadd.s32 1, %s38
      %p44 = scmp.ge.s32.totalorder %s43, 2
      %s45 = scalar_select %p44, 0, %s43
      %s46 = sadd.s32 1, %s37
      %s47 = scalar_select %p44, %s46, %s37
      %p48 = scmp.ge.s32.totalorder %s47, 1
      %s49 = scalar_select %p48, 0, %s47
      %s50 = ssub.s32 %s37, %s49
      %p51 = scmp.eq.s32.totalorder %s50, 0
      %s53 = sadd.s32 %s52, 1
      %s54 = scalar_select %p51, %s52, %s53
      %p57 = pneg %p51
      %p58 = scmp.eq.s32.totalorder %s30, 1
      %p59 = por %p57, %p58
      %p60 = scmp.ne.s32.totalorder %s52, %s55
      %p61 = scmp.eq.s32.totalorder %s30, 0
      %p62 = por %p60, %p61
      %p63 = scmp.ne.s32.totalorder %s52, %s55
      %p64 = scmp.eq.s32.totalorder %s35, 1
      %p65 = por %p63, %p64
      %p66 = scmp.ne.s32.totalorder %s55, %s56
      %p67 = scmp.eq.s32.totalorder %s35, 0
      %p68 = por %p66, %p67
      %p69 = scmp.ne.s32.totalorder %s55, %s56
      %p70 = scmp.eq.s32.totalorder %s36, 1
      %p71 = por %p69, %p70
      %p73 = scmp.ne.s32.totalorder %s56, %s72
      %p74 = scmp.eq.s32.totalorder %s36, 0
      %p75 = por %p73, %p74
      %s77 = sadd.s32 %s76, 1
      %p80 = scmp.eq.s32.totalorder %s30, 1
      %p81 = scmp.ne.s32.totalorder %s76, %s78
      %p82 = scmp.eq.s32.totalorder %s30, 0
      %p83 = por %p81, %p82
      %p84 = scmp.ne.s32.totalorder %s76, %s78
      %p85 = scmp.eq.s32.totalorder %s35, 1
      %p86 = por %p84, %p85
      %p87 = scmp.ne.s32.totalorder %s78, %s79
      %p88 = scmp.eq.s32.totalorder %s35, 0
      %p89 = por %p87, %p88
      %p90 = scmp.ne.s32.totalorder %s78, %s79
      %p91 = scmp.eq.s32.totalorder %s36, 1
      %p92 = por %p90, %p91
      %p94 = scmp.ne.s32.totalorder %s79, %s93
      %p95 = scmp.eq.s32.totalorder %s36, 0
      %p96 = por %p94, %p95
      %s98 = sadd.s32 %s97, 1
      %p101 = scmp.eq.s32.totalorder %s30, 1
      %p102 = scmp.ne.s32.totalorder %s97, %s99
      %p103 = scmp.eq.s32.totalorder %s30, 0
      %p104 = por %p102, %p103
      %p105 = scmp.ne.s32.totalorder %s97, %s99
      %p106 = scmp.eq.s32.totalorder %s35, 1
      %p107 = por %p105, %p106
      %p108 = scmp.ne.s32.totalorder %s99, %s100
      %p109 = scmp.eq.s32.totalorder %s35, 0
      %p110 = por %p108, %p109
      %p111 = scmp.ne.s32.totalorder %s99, %s100
      %p112 = scmp.eq.s32.totalorder %s36, 1
      %p113 = por %p111, %p112
      %p115 = scmp.ne.s32.totalorder %s100, %s114
      %p116 = scmp.eq.s32.totalorder %s36, 0
      %p117 = por %p115, %p116
      %s118 = ssub.s32 %s38, %s45
      %p119 = scmp.eq.s32.totalorder %s118, 0
      %s121 = sadd.s32 %s120, 1
      %s122 = scalar_select %p119, %s120, %s121
      %p125 = pneg %p119
      %p126 = scmp.eq.s32.totalorder %s30, 1
      %p127 = por %p125, %p126
      %p128 = scmp.ne.s32.totalorder %s120, %s123
      %p129 = scmp.eq.s32.totalorder %s30, 0
      %p130 = por %p128, %p129
      %p131 = scmp.ne.s32.totalorder %s120, %s123
      %p132 = scmp.eq.s32.totalorder %s35, 1
      %p133 = por %p131, %p132
      %p134 = scmp.ne.s32.totalorder %s123, %s124
      %p135 = scmp.eq.s32.totalorder %s35, 0
      %p136 = por %p134, %p135
      %p137 = scmp.ne.s32.totalorder %s123, %s124
      %p138 = scmp.eq.s32.totalorder %s36, 1
      %p139 = por %p137, %p138
      %p141 = scmp.ne.s32.totalorder %s124, %s140
      %p142 = scmp.eq.s32.totalorder %s36, 0
      %p143 = por %p141, %p142
      %s144 = ssub.s32 %s38, %s45
      %p145 = scmp.eq.s32.totalorder %s144, 0
      %s147 = sadd.s32 %s146, 1
      %s148 = scalar_select %p145, %s146, %s147
      %p151 = pneg %p145
      %p152 = scmp.eq.s32.totalorder %s30, 1
      %p153 = por %p151, %p152
      %p154 = scmp.ne.s32.totalorder %s146, %s149
      %p155 = scmp.eq.s32.totalorder %s30, 0
      %p156 = por %p154, %p155
      %p157 = scmp.ne.s32.totalorder %s146, %s149
      %p158 = scmp.eq.s32.totalorder %s35, 1
      %p159 = por %p157, %p158
      %p160 = scmp.ne.s32.totalorder %s149, %s150
      %p161 = scmp.eq.s32.totalorder %s35, 0
      %p162 = por %p160, %p161
      %p163 = scmp.ne.s32.totalorder %s149, %s150
      %p164 = scmp.eq.s32.totalorder %s36, 1
      %p165 = por %p163, %p164
      %p167 = scmp.ne.s32.totalorder %s150, %s166
      %p168 = scmp.eq.s32.totalorder %s36, 0
      %p169 = por %p167, %p168
      %s170 = ssub.s32 %s38, %s45
      %p171 = scmp.eq.s32.totalorder %s170, 0
      %s173 = sadd.s32 %s172, 1
      %s174 = scalar_select %p171, %s172, %s173
      %p177 = pneg %p171
      %p178 = scmp.eq.s32.totalorder %s30, 1
      %p179 = por %p177, %p178
      %p180 = scmp.ne.s32.totalorder %s172, %s175
      %p181 = scmp.eq.s32.totalorder %s30, 0
      %p182 = por %p180, %p181
      %p183 = scmp.ne.s32.totalorder %s172, %s175
      %p184 = scmp.eq.s32.totalorder %s35, 1
      %p185 = por %p183, %p184
      %p186 = scmp.ne.s32.totalorder %s175, %s176
      %p187 = scmp.eq.s32.totalorder %s35, 0
      %p188 = por %p186, %p187
      %p189 = scmp.ne.s32.totalorder %s175, %s176
      %p190 = scmp.eq.s32.totalorder %s36, 1
      %p191 = por %p189, %p190
      %p193 = scmp.ne.s32.totalorder %s176, %s192
      %p194 = scmp.eq.s32.totalorder %s36, 0
      %p195 = por %p193, %p194
      %s196 = ssub.s32 %s38, %s45
      %p197 = scmp.eq.s32.totalorder %s196, 0
      %s199 = sadd.s32 %s198, 1
      %s200 = scalar_select %p197, %s198, %s199
      %p203 = pneg %p197
      %p204 = scmp.eq.s32.totalorder %s30, 1
      %p205 = por %p203, %p204
      %p206 = scmp.ne.s32.totalorder %s198, %s201
      %p207 = scmp.eq.s32.totalorder %s30, 0
      %p208 = por %p206, %p207
      %p209 = scmp.ne.s32.totalorder %s198, %s201
      %p210 = scmp.eq.s32.totalorder %s35, 1
      %p211 = por %p209, %p210
      %p212 = scmp.ne.s32.totalorder %s201, %s202
      %p213 = scmp.eq.s32.totalorder %s35, 0
      %p214 = por %p212, %p213
      %p215 = scmp.ne.s32.totalorder %s201, %s202
      %p216 = scmp.eq.s32.totalorder %s36, 1
      %p217 = por %p215, %p216
      %p219 = scmp.ne.s32.totalorder %s202, %s218
      %p220 = scmp.eq.s32.totalorder %s36, 0
      %p221 = por %p219, %p220
      %s222 = ssub.s32 %s38, %s45
      %p223 = scmp.eq.s32.totalorder %s222, 0
      %s225 = sadd.s32 %s224, 1
      %s226 = scalar_select %p223, %s224, %s225
      %p229 = pneg %p223
      %p230 = scmp.eq.s32.totalorder %s30, 1
      %p231 = por %p229, %p230
      %p232 = scmp.ne.s32.totalorder %s224, %s227
      %p233 = scmp.eq.s32.totalorder %s30, 0
      %p234 = por %p232, %p233
      %p235 = scmp.ne.s32.totalorder %s224, %s227
      %p236 = scmp.eq.s32.totalorder %s35, 1
      %p237 = por %p235, %p236
      %p238 = scmp.ne.s32.totalorder %s227, %s228
      %p239 = scmp.eq.s32.totalorder %s35, 0
      %p240 = por %p238, %p239
      %p241 = scmp.ne.s32.totalorder %s227, %s228
      %p242 = scmp.eq.s32.totalorder %s36, 1
      %p243 = por %p241, %p242
      %p245 = scmp.ne.s32.totalorder %s228, %s244
      %p246 = scmp.eq.s32.totalorder %s36, 0
      %p247 = por %p245, %p246
      %s248 = ssub.s32 %s38, %s45
      %p249 = scmp.eq.s32.totalorder %s248, 0
      %s251 = sadd.s32 %s250, 1
      %s252 = scalar_select %p249, %s250, %s251
      %p255 = pneg %p249
      %p256 = scmp.eq.s32.totalorder %s30, 1
      %p257 = por %p255, %p256
      %p258 = scmp.ne.s32.totalorder %s250, %s253
      %p259 = scmp.eq.s32.totalorder %s30, 0
      %p260 = por %p258, %p259
      %p261 = scmp.ne.s32.totalorder %s250, %s253
      %p262 = scmp.eq.s32.totalorder %s35, 1
      %p263 = por %p261, %p262
      %p264 = scmp.ne.s32.totalorder %s253, %s254
      %p265 = scmp.eq.s32.totalorder %s35, 0
      %p266 = por %p264, %p265
      %p267 = scmp.ne.s32.totalorder %s253, %s254
      %p268 = scmp.eq.s32.totalorder %s36, 1
      %p269 = por %p267, %p268
      %p271 = scmp.ne.s32.totalorder %s254, %s270
      %p272 = scmp.eq.s32.totalorder %s36, 0
      %p273 = por %p271, %p272
      %s274 = ssub.s32 %s38, %s45
      %p275 = scmp.eq.s32.totalorder %s274, 0
      %s277 = sadd.s32 %s276, 1
      %s278 = scalar_select %p275, %s276, %s277
      %p281 = pneg %p275
      %p282 = scmp.eq.s32.totalorder %s30, 1
      %p283 = por %p281, %p282
      %p284 = scmp.ne.s32.totalorder %s276, %s279
      %p285 = scmp.eq.s32.totalorder %s30, 0
      %p286 = por %p284, %p285
      %p287 = scmp.ne.s32.totalorder %s276, %s279
      %p288 = scmp.eq.s32.totalorder %s35, 1
      %p289 = por %p287, %p288
      %p290 = scmp.ne.s32.totalorder %s279, %s280
      %p291 = scmp.eq.s32.totalorder %s35, 0
      %p292 = por %p290, %p291
      %p293 = scmp.ne.s32.totalorder %s279, %s280
      %p294 = scmp.eq.s32.totalorder %s36, 1
      %p295 = por %p293, %p294
      %p297 = scmp.ne.s32.totalorder %s280, %s296
      %p298 = scmp.eq.s32.totalorder %s36, 0
      %p299 = por %p297, %p298
      %s300 = ssub.s32 %s38, %s45
      %p301 = scmp.eq.s32.totalorder %s300, 0
      %s303 = sadd.s32 %s302, 1
      %s304 = scalar_select %p301, %s302, %s303
      %p307 = pneg %p301
      %p308 = scmp.eq.s32.totalorder %s30, 1
      %p309 = por %p307, %p308
      %p310 = scmp.ne.s32.totalorder %s302, %s305
      %p311 = scmp.eq.s32.totalorder %s30, 0
      %p312 = por %p310, %p311
      %p313 = scmp.ne.s32.totalorder %s302, %s305
      %p314 = scmp.eq.s32.totalorder %s35, 1
      %p315 = por %p313, %p314
      %p316 = scmp.ne.s32.totalorder %s305, %s306
      %p317 = scmp.eq.s32.totalorder %s35, 0
      %p318 = por %p316, %p317
      %p319 = scmp.ne.s32.totalorder %s305, %s306
      %p320 = scmp.eq.s32.totalorder %s36, 1
      %p321 = por %p319, %p320
      %p323 = scmp.ne.s32.totalorder %s306, %s322
      %p324 = scmp.eq.s32.totalorder %s36, 0
      %p325 = por %p323, %p324
      %s326 = ssub.s32 %s38, %s45
      %p327 = scmp.eq.s32.totalorder %s326, 0
      %s329 = sadd.s32 %s328, 1
      %s330 = scalar_select %p327, %s328, %s329
      %p333 = pneg %p327
      %p334 = scmp.eq.s32.totalorder %s30, 1
      %p335 = por %p333, %p334
      %p336 = scmp.ne.s32.totalorder %s328, %s331
      %p337 = scmp.eq.s32.totalorder %s30, 0
      %p338 = por %p336, %p337
      %p339 = scmp.ne.s32.totalorder %s328, %s331
      %p340 = scmp.eq.s32.totalorder %s35, 1
      %p341 = por %p339, %p340
      %p342 = scmp.ne.s32.totalorder %s331, %s332
      %p343 = scmp.eq.s32.totalorder %s35, 0
      %p344 = por %p342, %p343
      %p345 = scmp.ne.s32.totalorder %s331, %s332
      %p346 = scmp.eq.s32.totalorder %s36, 1
      %p347 = por %p345, %p346
      %p349 = scmp.ne.s32.totalorder %s332, %s348
      %p350 = scmp.eq.s32.totalorder %s36, 0
      %p351 = por %p349, %p350
      %s352 = ssub.s32 %s38, %s45
      %p353 = scmp.eq.s32.totalorder %s352, 0
      %s355 = sadd.s32 %s354, 1
      %s356 = scalar_select %p353, %s354, %s355
      %p359 = pneg %p353
      %p360 = scmp.eq.s32.totalorder %s30, 1
      %p361 = por %p359, %p360
      %p362 = scmp.ne.s32.totalorder %s354, %s357
      %p363 = scmp.eq.s32.totalorder %s30, 0
      %p364 = por %p362, %p363
      %p365 = scmp.ne.s32.totalorder %s354, %s357
      %p366 = scmp.eq.s32.totalorder %s35, 1
      %p367 = por %p365, %p366
      %p368 = scmp.ne.s32.totalorder %s357, %s358
      %p369 = scmp.eq.s32.totalorder %s35, 0
      %p370 = por %p368, %p369
      %p371 = scmp.ne.s32.totalorder %s357, %s358
      %p372 = scmp.eq.s32.totalorder %s36, 1
      %p373 = por %p371, %p372
      %p375 = scmp.ne.s32.totalorder %s358, %s374
      %p376 = scmp.eq.s32.totalorder %s36, 0
      %p377 = por %p375, %p376
      %s379 = sadd.s32 %s378, 1
      %p382 = scmp.eq.s32.totalorder %s30, 1
      %p383 = scmp.ne.s32.totalorder %s378, %s380
      %p384 = scmp.eq.s32.totalorder %s30, 0
      %p385 = por %p383, %p384
      %p386 = scmp.ne.s32.totalorder %s378, %s380
      %p387 = scmp.eq.s32.totalorder %s35, 1
      %p388 = por %p386, %p387
      %p389 = scmp.ne.s32.totalorder %s380, %s381
      %p390 = scmp.eq.s32.totalorder %s35, 0
      %p391 = por %p389, %p390
      %p392 = scmp.ne.s32.totalorder %s380, %s381
      %p393 = scmp.eq.s32.totalorder %s36, 1
      %p394 = por %p392, %p393
      %p396 = scmp.ne.s32.totalorder %s381, %s395
      %p397 = scmp.eq.s32.totalorder %s36, 0
      %p398 = por %p396, %p397
      %s400 = sadd.s32 %s399, 1
      %p403 = scmp.eq.s32.totalorder %s30, 1
      %p404 = scmp.ne.s32.totalorder %s399, %s401
      %p405 = scmp.eq.s32.totalorder %s30, 0
      %p406 = por %p404, %p405
      %p407 = scmp.ne.s32.totalorder %s399, %s401
      %p408 = scmp.eq.s32.totalorder %s35, 1
      %p409 = por %p407, %p408
      %p410 = scmp.ne.s32.totalorder %s401, %s402
      %p411 = scmp.eq.s32.totalorder %s35, 0
      %p412 = por %p410, %p411
      %p413 = scmp.ne.s32.totalorder %s401, %s402
      %p414 = scmp.eq.s32.totalorder %s36, 1
      %p415 = por %p413, %p414
      %p417 = scmp.ne.s32.totalorder %s402, %s416
      %p418 = scmp.eq.s32.totalorder %s36, 0
      %p419 = por %p417, %p418
      %s420 = ssub.s32 %s37, %s49
      %p421 = scmp.eq.s32.totalorder %s420, 0
      %s423 = sadd.s32 %s422, 1
      %s424 = scalar_select %p421, %s422, %s423
      %p427 = pneg %p421
      %p428 = scmp.eq.s32.totalorder %s30, 1
      %p429 = por %p427, %p428
      %p430 = scmp.ne.s32.totalorder %s422, %s425
      %p431 = scmp.eq.s32.totalorder %s30, 0
      %p432 = por %p430, %p431
      %p433 = scmp.ne.s32.totalorder %s422, %s425
      %p434 = scmp.eq.s32.totalorder %s35, 1
      %p435 = por %p433, %p434
      %p436 = scmp.ne.s32.totalorder %s425, %s426
      %p437 = scmp.eq.s32.totalorder %s35, 0
      %p438 = por %p436, %p437
      %p439 = scmp.ne.s32.totalorder %s425, %s426
      %p440 = scmp.eq.s32.totalorder %s36, 1
      %p441 = por %p439, %p440
      %p443 = scmp.ne.s32.totalorder %s426, %s442
      %p444 = scmp.eq.s32.totalorder %s36, 0
      %p445 = por %p443, %p444
      %p446 = scmp.le.s32.totalorder 1, %s30
      %p447 = scmp.lt.s32.totalorder %s30, 3
      %p448 = pnand %p446, %p447
      %p449 = pneg %p448
      // Predicated region
      $region9: #{tpu_custom_call.1} parent=5 // pred_check
        _
      $region10: #{tpu_custom_call.1} parent=5 // pred_check_branch
        %451 = sbr.rel (%p448) target = $region12
      $region11: #{tpu_custom_call.1} parent=5 // pred_region
        %s452 = ssub.s32 %s30, 1
        // Predicated region
        $region13: #{tpu_custom_call.1} parent=11 // pred_check
          %p453 = pneg %p68
        $region14: #{tpu_custom_call.1} parent=11 // pred_check_branch
          %455 = sbr.rel (%p453) target = $region16
        $region15: #{tpu_custom_call.1} parent=11 // pred_region
          %s457 = ssub.s32 128, 128
          %458 = vsyncadd [#allocation4], %s457
          %s459 = smul.addr %s39, 128
          %s460 = scalar_lea.hbm %s0, %s459
          %s462 = sshll.u32 [#allocation3], 4
          %s463 = int_to_ptr.vmem [resolvable:$true] %s462
          %465 = dma.hbm_to_vmem [thread:$0]  %s460, 128, %s463, [#allocation4]
        $region16: #{tpu_custom_call.1} parent=11 // pred_fallthru
          _
        // Predicated region
        $region17: #{tpu_custom_call.1} parent=11 // pred_check
          %p466 = pneg %p89
        $region18: #{tpu_custom_call.1} parent=11 // pred_check_branch
          %468 = sbr.rel (%p466) target = $region20
        $region19: #{tpu_custom_call.1} parent=11 // pred_region
          %s470 = ssub.s32 1024, 1024
          %471 = vsyncadd [#allocation7], %s470
          %s472 = sshll.u32 [#allocation6], 4
          %s473 = int_to_ptr.vmem [resolvable:$true] %s472
          %478 = dma.hbm_to_vmem [thread:$0]  %s1, 1024, %s473, [#allocation7], 64, 64, 4
        $region20: #{tpu_custom_call.1} parent=11 // pred_fallthru
          _
        // Predicated region
        $region21: #{tpu_custom_call.1} parent=11 // pred_check
          %p479 = pneg %p110
        $region22: #{tpu_custom_call.1} parent=11 // pred_check_branch
          %481 = sbr.rel (%p479) target = $region24
        $region23: #{tpu_custom_call.1} parent=11 // pred_region
          %s483 = ssub.s32 16, 16
          %484 = vsyncadd [#allocation7], %s483
          %s486 = sshll.u32 [#allocation8], 4
          %s487 = int_to_ptr.vmem [resolvable:$true] %s486
          %489 = dma.hbm_to_vmem [thread:$0]  %s2, 16, %s487, [#allocation7]
        $region24: #{tpu_custom_call.1} parent=11 // pred_fallthru
          _
        // Predicated region
        $region25: #{tpu_custom_call.1} parent=11 // pred_check
          %p490 = pneg %p391
        $region26: #{tpu_custom_call.1} parent=11 // pred_check_branch
          %492 = sbr.rel (%p490) target = $region28
        $region27: #{tpu_custom_call.1} parent=11 // pred_region
          %s494 = ssub.s32 1024, 1024
          %495 = vsyncadd [#allocation13], %s494
          %s496 = sshll.u32 [#allocation14], 4
          %s497 = int_to_ptr.vmem [resolvable:$true] %s496
          %502 = dma.hbm_to_vmem [thread:$0]  %s13, 1024, %s497, [#allocation13], 64, 64, 4
        $region28: #{tpu_custom_call.1} parent=11 // pred_fallthru
          _
        // Predicated region
        $region29: #{tpu_custom_call.1} parent=11 // pred_check
          %p503 = pneg %p412
        $region30: #{tpu_custom_call.1} parent=11 // pred_check_branch
          %505 = sbr.rel (%p503) target = $region32
        $region31: #{tpu_custom_call.1} parent=11 // pred_region
          _
        $region32: #{tpu_custom_call.1} parent=11 // pred_fallthru
          _
      $region12: #{tpu_custom_call.1} parent=5 // pred_fallthru
        _
      %p506 = scmp.lt.s32.totalorder %s30, 2
      // Predicated region
      $region33: #{tpu_custom_call.1} parent=5 // pred_check
        %p507 = pneg %p506
      $region34: #{tpu_custom_call.1} parent=5 // pred_check_branch
        %509 = sbr.rel (%p507) target = $region36
      $region35: #{tpu_custom_call.1} parent=5 // pred_region
        // Predicated region
        $region37: #{tpu_custom_call.1} parent=35 // pred_check
          %p510 = pneg %p130
        $region38: #{tpu_custom_call.1} parent=35 // pred_check_branch
          %512 = sbr.rel (%p510) target = $region40
        $region39: #{tpu_custom_call.1} parent=35 // pred_region
          %s513 = sand.u32 %s30, 1
          %s514 = scalar_lea.sflag [#allocation10], %s513
          %s515 = sand.u32 %s120, 1
          %s516 = smul.addr %s515, 64
          %s517 = scalar_lea.vmem [#allocation9], %s516
          %s519 = ssub.s32 1024, 1024
          %520 = vsyncadd %s514, %s519
          %s521 = smul.addr %s38, 16
          %s522 = smul.addr %s521, 64
          %s523 = scalar_lea.hbm %s3, %s522
          %s524 = sshll.u32 %s517, 4
          %s525 = int_to_ptr.vmem [resolvable:$true] %s524
          %530 = dma.hbm_to_vmem [thread:$0]  %s523, 1024, %s525, %s514, 64, 64, 4
        $region40: #{tpu_custom_call.1} parent=35 // pred_fallthru
          _
        // Predicated region
        $region41: #{tpu_custom_call.1} parent=35 // pred_check
          %p531 = pneg %p156
        $region42: #{tpu_custom_call.1} parent=35 // pred_check_branch
          %533 = sbr.rel (%p531) target = $region44
        $region43: #{tpu_custom_call.1} parent=35 // pred_region
          %p534 = scmp.lt.s32.totalorder %s38, 1
          %s535 = scalar_select %p534, %s38, 1
          %s536 = scalar_lea.vmem %s4, %s535
        $region44: #{tpu_custom_call.1} parent=35 // pred_fallthru
          _
        // Predicated region
        $region45: #{tpu_custom_call.1} parent=35 // pred_check
          %p537 = pneg %p182
        $region46: #{tpu_custom_call.1} parent=35 // pred_check_branch
          %539 = sbr.rel (%p537) target = $region48
        $region47: #{tpu_custom_call.1} parent=35 // pred_region
          %p540 = scmp.lt.s32.totalorder %s38, 1
          %s541 = scalar_select %p540, %s38, 1
          %s542 = scalar_lea.vmem %s5, %s541
        $region48: #{tpu_custom_call.1} parent=35 // pred_fallthru
          _
        // Predicated region
        $region49: #{tpu_custom_call.1} parent=35 // pred_check
          %p543 = pneg %p208
        $region50: #{tpu_custom_call.1} parent=35 // pred_check_branch
          %545 = sbr.rel (%p543) target = $region52
        $region51: #{tpu_custom_call.1} parent=35 // pred_region
          %p546 = scmp.lt.s32.totalorder %s38, 1
          %s547 = scalar_select %p546, %s38, 1
          %s548 = scalar_lea.vmem %s6, %s547
        $region52: #{tpu_custom_call.1} parent=35 // pred_fallthru
          _
        // Predicated region
        $region53: #{tpu_custom_call.1} parent=35 // pred_check
          %p549 = pneg %p234
        $region54: #{tpu_custom_call.1} parent=35 // pred_check_branch
          %551 = sbr.rel (%p549) target = $region56
        $region55: #{tpu_custom_call.1} parent=35 // pred_region
          %s552 = sand.u32 %s30, 1
          %s553 = scalar_lea.sflag [#allocation10], %s552
          %s554 = sand.u32 %s224, 1
          %s555 = smul.addr %s554, 128
          %s556 = scalar_lea.vmem [#allocation11], %s555
          %s558 = ssub.s32 2048, 2048
          %559 = vsyncadd %s553, %s558
          %s560 = smul.addr %s38, 32
          %s561 = smul.addr %s560, 64
          %s562 = scalar_lea.hbm %s7, %s561
          %s563 = sshll.u32 %s556, 4
          %s564 = int_to_ptr.vmem [resolvable:$true] %s563
          %569 = dma.hbm_to_vmem [thread:$0]  %s562, 2048, %s564, %s553, 128, 128, 8
        $region56: #{tpu_custom_call.1} parent=35 // pred_fallthru
          _
        // Predicated region
        $region57: #{tpu_custom_call.1} parent=35 // pred_check
          %p570 = pneg %p260
        $region58: #{tpu_custom_call.1} parent=35 // pred_check_branch
          %572 = sbr.rel (%p570) target = $region60
        $region59: #{tpu_custom_call.1} parent=35 // pred_region
          %p573 = scmp.lt.s32.totalorder %s38, 1
          %s574 = scalar_select %p573, %s38, 1
          %s575 = smul.addr %s574, 2
          %s576 = scalar_lea.vmem %s8, %s575
        $region60: #{tpu_custom_call.1} parent=35 // pred_fallthru
          _
        // Predicated region
        $region61: #{tpu_custom_call.1} parent=35 // pred_check
          %p577 = pneg %p286
        $region62: #{tpu_custom_call.1} parent=35 // pred_check_branch
          %579 = sbr.rel (%p577) target = $region64
        $region63: #{tpu_custom_call.1} parent=35 // pred_region
          %s580 = sand.u32 %s30, 1
          %s581 = scalar_lea.sflag [#allocation13], %s580
          %s582 = sand.u32 %s276, 1
          %s583 = smul.addr %s582, 128
          %s584 = scalar_lea.vmem [#allocation12], %s583
          %s586 = ssub.s32 2048, 2048
          %587 = vsyncadd %s581, %s586
          %s588 = smul.addr %s38, 32
          %s589 = smul.addr %s588, 64
          %s590 = scalar_lea.hbm %s9, %s589
          %s591 = sshll.u32 %s584, 4
          %s592 = int_to_ptr.vmem [resolvable:$true] %s591
          %597 = dma.hbm_to_vmem [thread:$0]  %s590, 2048, %s592, %s581, 64, 64, 4
        $region64: #{tpu_custom_call.1} parent=35 // pred_fallthru
          _
        // Predicated region
        $region65: #{tpu_custom_call.1} parent=35 // pred_check
          %p598 = pneg %p312
        $region66: #{tpu_custom_call.1} parent=35 // pred_check_branch
          %600 = sbr.rel (%p598) target = $region68
        $region67: #{tpu_custom_call.1} parent=35 // pred_region
          %p601 = scmp.lt.s32.totalorder %s38, 1
          %s602 = scalar_select %p601, %s38, 1
          %s603 = scalar_lea.vmem %s10, %s602
        $region68: #{tpu_custom_call.1} parent=35 // pred_fallthru
          _
        // Predicated region
        $region69: #{tpu_custom_call.1} parent=35 // pred_check
          %p604 = pneg %p338
        $region70: #{tpu_custom_call.1} parent=35 // pred_check_branch
          %606 = sbr.rel (%p604) target = $region72
        $region71: #{tpu_custom_call.1} parent=35 // pred_region
          %p607 = scmp.lt.s32.totalorder %s38, 1
          %s608 = scalar_select %p607, %s38, 1
          %s609 = scalar_lea.vmem %s11, %s608
        $region72: #{tpu_custom_call.1} parent=35 // pred_fallthru
          _
        // Predicated region
        $region73: #{tpu_custom_call.1} parent=35 // pred_check
          %p610 = pneg %p364
        $region74: #{tpu_custom_call.1} parent=35 // pred_check_branch
          %612 = sbr.rel (%p610) target = $region76
        $region75: #{tpu_custom_call.1} parent=35 // pred_region
          %p613 = scmp.lt.s32.totalorder %s38, 1
          %s614 = scalar_select %p613, %s38, 1
          %s615 = scalar_lea.vmem %s12, %s614
        $region76: #{tpu_custom_call.1} parent=35 // pred_fallthru
          _
      $region36: #{tpu_custom_call.1} parent=5 // pred_fallthru
        _
      %p616 = scmp.le.s32.totalorder 1, %s30
      %p617 = scmp.lt.s32.totalorder %s30, 3
      %p618 = pnand %p616, %p617
      %p619 = pneg %p618
      // Predicated region
      $region77: #{tpu_custom_call.1} parent=5 // pred_check
        _
      $region78: #{tpu_custom_call.1} parent=5 // pred_check_branch
        %621 = sbr.rel (%p618) target = $region80
      $region79: #{tpu_custom_call.1} parent=5 // pred_region
        %s622 = ssub.s32 %s30, 1
        // Predicated region
        $region81: #{tpu_custom_call.1} parent=79 // pred_check
          %p623 = pneg %p68
        $region82: #{tpu_custom_call.1} parent=79 // pred_check_branch
          %625 = sbr.rel (%p623) target = $region84
        $region83: #{tpu_custom_call.1} parent=79 // pred_region
          %626 = dma.done [#allocation4], 128
        $region84: #{tpu_custom_call.1} parent=79 // pred_fallthru
          _
        // Predicated region
        $region85: #{tpu_custom_call.1} parent=79 // pred_check
          %p627 = pneg %p89
        $region86: #{tpu_custom_call.1} parent=79 // pred_check_branch
          %629 = sbr.rel (%p627) target = $region88
        $region87: #{tpu_custom_call.1} parent=79 // pred_region
          %630 = dma.done [#allocation7], 1024
        $region88: #{tpu_custom_call.1} parent=79 // pred_fallthru
          _
        // Predicated region
        $region89: #{tpu_custom_call.1} parent=79 // pred_check
          %p631 = pneg %p110
        $region90: #{tpu_custom_call.1} parent=79 // pred_check_branch
          %633 = sbr.rel (%p631) target = $region92
        $region91: #{tpu_custom_call.1} parent=79 // pred_region
          %634 = dma.done [#allocation7], 16
        $region92: #{tpu_custom_call.1} parent=79 // pred_fallthru
          _
        %s635 = sand.u32 %s35, 1
        %s636 = scalar_lea.sflag [#allocation10], %s635
        %s637 = sand.u32 %s123, 1
        %s638 = smul.addr %s637, 64
        %s639 = scalar_lea.vmem [#allocation9], %s638
        // Predicated region
        $region93: #{tpu_custom_call.1} parent=79 // pred_check
          %p640 = pneg %p136
        $region94: #{tpu_custom_call.1} parent=79 // pred_check_branch
          %642 = sbr.rel (%p640) target = $region96
        $region95: #{tpu_custom_call.1} parent=79 // pred_region
          %643 = dma.done %s636, 1024
        $region96: #{tpu_custom_call.1} parent=79 // pred_fallthru
          _
        %s644 = sand.u32 %s35, 1
        %s645 = scalar_lea.sflag [#allocation10], %s644
        %s646 = sand.u32 %s227, 1
        %s647 = smul.addr %s646, 128
        %s648 = scalar_lea.vmem [#allocation11], %s647
        // Predicated region
        $region97: #{tpu_custom_call.1} parent=79 // pred_check
          %p649 = pneg %p240
        $region98: #{tpu_custom_call.1} parent=79 // pred_check_branch
          %651 = sbr.rel (%p649) target = $region100
        $region99: #{tpu_custom_call.1} parent=79 // pred_region
          %652 = dma.done %s645, 2048
        $region100: #{tpu_custom_call.1} parent=79 // pred_fallthru
          _
        %s653 = sand.u32 %s35, 1
        %s654 = scalar_lea.sflag [#allocation13], %s653
        %s655 = sand.u32 %s279, 1
        %s656 = smul.addr %s655, 128
        %s657 = scalar_lea.vmem [#allocation12], %s656
        // Predicated region
        $region101: #{tpu_custom_call.1} parent=79 // pred_check
          %p658 = pneg %p292
        $region102: #{tpu_custom_call.1} parent=79 // pred_check_branch
          %660 = sbr.rel (%p658) target = $region104
        $region103: #{tpu_custom_call.1} parent=79 // pred_region
          %661 = dma.done %s654, 2048
        $region104: #{tpu_custom_call.1} parent=79 // pred_fallthru
          _
        // Predicated region
        $region105: #{tpu_custom_call.1} parent=79 // pred_check
          %p662 = pneg %p391
        $region106: #{tpu_custom_call.1} parent=79 // pred_check_branch
          %664 = sbr.rel (%p662) target = $region108
        $region107: #{tpu_custom_call.1} parent=79 // pred_region
          %665 = dma.done [#allocation13], 1024
        $region108: #{tpu_custom_call.1} parent=79 // pred_fallthru
          _
        %p666 = pneg %p68
        %p667 = pneg %p65
        %p668 = pneg %p89
        %p669 = pneg %p86
        %p670 = pneg %p110
        %p671 = pneg %p107
        %s672 = sand.u32 %s35, 1
        %s673 = scalar_lea.sflag [#allocation10], %s672
        %s674 = sand.u32 %s123, 1
        %s675 = smul.addr %s674, 64
        %s676 = scalar_lea.vmem [#allocation9], %s675
        %p677 = pneg %p136
        %p678 = pneg %p133
        %p679 = scmp.lt.s32.totalorder %s40, 1
        %s680 = scalar_select %p679, %s40, 1
        %s681 = scalar_lea.vmem %s4, %s680
        %p682 = pneg %p162
        %p683 = pneg %p159
        %p684 = scmp.lt.s32.totalorder %s40, 1
        %s685 = scalar_select %p684, %s40, 1
        %s686 = scalar_lea.vmem %s5, %s685
        %p687 = pneg %p188
        %p688 = pneg %p185
        %p689 = scmp.lt.s32.totalorder %s40, 1
        %s690 = scalar_select %p689, %s40, 1
        %s691 = scalar_lea.vmem %s6, %s690
        %p692 = pneg %p214
        %p693 = pneg %p211
        %s694 = sand.u32 %s35, 1
        %s695 = scalar_lea.sflag [#allocation10], %s694
        %s696 = sand.u32 %s227, 1
        %s697 = smul.addr %s696, 128
        %s698 = scalar_lea.vmem [#allocation11], %s697
        %p699 = pneg %p240
        %p700 = pneg %p237
        %p701 = scmp.lt.s32.totalorder %s40, 1
        %s702 = scalar_select %p701, %s40, 1
        %s703 = smul.addr %s702, 2
        %s704 = scalar_lea.vmem %s8, %s703
        %p705 = pneg %p266
        %p706 = pneg %p263
        %s707 = sand.u32 %s35, 1
        %s708 = scalar_lea.sflag [#allocation13], %s707
        %s709 = sand.u32 %s279, 1
        %s710 = smul.addr %s709, 128
        %s711 = scalar_lea.vmem [#allocation12], %s710
        %p712 = pneg %p292
        %p713 = pneg %p289
        %p714 = scmp.lt.s32.totalorder %s40, 1
        %s715 = scalar_select %p714, %s40, 1
        %s716 = scalar_lea.vmem %s10, %s715
        %p717 = pneg %p318
        %p718 = pneg %p315
        %p719 = scmp.lt.s32.totalorder %s40, 1
        %s720 = scalar_select %p719, %s40, 1
        %s721 = scalar_lea.vmem %s11, %s720
        %p722 = pneg %p344
        %p723 = pneg %p341
        %p724 = scmp.lt.s32.totalorder %s40, 1
        %s725 = scalar_select %p724, %s40, 1
        %s726 = scalar_lea.vmem %s12, %s725
        %p727 = pneg %p370
        %p728 = pneg %p367
        %p729 = pneg %p391
        %p730 = pneg %p388
        %p731 = pneg %p412
        %p732 = pneg %p409
        %p733 = pneg %p438
        %p734 = pneg %p435
        %p735 = scmp.lt.s32.totalorder %s40, 1
        %s736 = scalar_select %p735, %s40, 1
        %s737 = scalar_lea.vmem %s4, %s736
        %p738 = scmp.lt.s32.totalorder %s40, 1
        %s739 = scalar_select %p738, %s40, 1
        %s740 = scalar_lea.vmem %s5, %s739
        %p741 = scmp.lt.s32.totalorder %s40, 1
        %s742 = scalar_select %p741, %s40, 1
        %s743 = scalar_lea.vmem %s6, %s742
        %p744 = scmp.lt.s32.totalorder %s40, 1
        %s745 = scalar_select %p744, %s40, 1
        %s746 = smul.addr %s745, 2
        %s747 = scalar_lea.vmem %s8, %s746
        %p748 = scmp.lt.s32.totalorder %s40, 1
        %s749 = scalar_select %p748, %s40, 1
        %s750 = scalar_lea.vmem %s10, %s749
        %p751 = scmp.lt.s32.totalorder %s40, 1
        %s752 = scalar_select %p751, %s40, 1
        %s753 = scalar_lea.vmem %s11, %s752
        %p754 = scmp.lt.s32.totalorder %s40, 1
        %s755 = scalar_select %p754, %s40, 1
        %s756 = scalar_lea.vmem %s12, %s755
        %p758 = scmp.eq.s32.totalorder %s40, 0
        // Predicated region
        $region109: #{tpu_custom_call.1} parent=79 // pred_check
          %p759 = pneg %p758
        $region110: #{tpu_custom_call.1} parent=79 // pred_check_branch
          %761 = sbr.rel (%p759) target = $region112
        $region111: #{tpu_custom_call.1} parent=79 // pred_region
          %v762 = vld [vmem:[#allocation3] sm:$0xff]
          %v763 = vpack.c.bf16 %v762, %v762
          %v764 = vld [vmem:[#allocation6] sm:$0xf]
          %v765 = vld [vmem:[#allocation6 + $0x4] sm:$0xf]
          %v766 = vld [vmem:[#allocation6 + $0x8] sm:$0xf]
          %v767 = vld [vmem:[#allocation6 + $0xc] sm:$0xf]
          %v768 = vld [vmem:[#allocation6 + $0x10] sm:$0xf]
          %v769 = vld [vmem:[#allocation6 + $0x14] sm:$0xf]
          %v770 = vld [vmem:[#allocation6 + $0x18] sm:$0xf]
          %v771 = vld [vmem:[#allocation6 + $0x1c] sm:$0xf]
          %v772 = vld [vmem:[#allocation6 + $0x20] sm:$0xf]
          %v773 = vld [vmem:[#allocation6 + $0x24] sm:$0xf]
          %v774 = vld [vmem:[#allocation6 + $0x28] sm:$0xf]
          %v775 = vld [vmem:[#allocation6 + $0x2c] sm:$0xf]
          %v776 = vld [vmem:[#allocation6 + $0x30] sm:$0xf]
          %v777 = vld [vmem:[#allocation6 + $0x34] sm:$0xf]
          %v778 = vld [vmem:[#allocation6 + $0x38] sm:$0xf]
          %v779 = vld [vmem:[#allocation6 + $0x3c] sm:$0xf]
          %v780 = vld [vmem:[#allocation8] sm:$0x1]
          %v782 = vlaneseq
          %v783 = vshrl.u32 %v782, 7
          %v784 = vsub.s32 0, %v783
          %v785 = vrot.slane %v780, %v784
          %v803 = vunpack.c.l.b16 %v764
          %v804 = vunpack.c.l.b16 %v765
          %v805 = vunpack.c.l.b16 %v766
          %v806 = vunpack.c.l.b16 %v767
          %v807 = vunpack.c.l.b16 %v768
          %v808 = vunpack.c.l.b16 %v769
          %v809 = vunpack.c.l.b16 %v770
          %v810 = vunpack.c.l.b16 %v771
          %v811 = vunpack.c.l.b16 %v772
          %v812 = vunpack.c.l.b16 %v773
          %v813 = vunpack.c.l.b16 %v774
          %v814 = vunpack.c.l.b16 %v775
          %v815 = vunpack.c.l.b16 %v776
          %v816 = vunpack.c.l.b16 %v777
          %v817 = vunpack.c.l.b16 %v778
          %v818 = vunpack.c.l.b16 %v779
          %v819 = vpack.c.b16 %v804, %v803
          %v820 = vpack.c.b16 %v806, %v805
          %v821 = vpack.c.b16 %v808, %v807
          %v822 = vpack.c.b16 %v810, %v809
          %v823 = vpack.c.b16 %v812, %v811
          %v824 = vpack.c.b16 %v814, %v813
          %v825 = vpack.c.b16 %v816, %v815
          %v826 = vpack.c.b16 %v818, %v817
          %835 = vmatprep.subr.bf16.mxu0 0
          %836 = vmatpush1.bf16.msra.mxu0 %v826
          %837 = vmatprep.subr.bf16.mxu0 0
          %838 = vmatpush1.bf16.msra.mxu0 %v825
          %839 = vmatprep.subr.bf16.mxu0 0
          %840 = vmatpush1.bf16.msra.mxu0 %v824
          %841 = vmatprep.subr.bf16.mxu0 0
          %842 = vmatpush1.bf16.msra.mxu0 %v823
          %843 = vmatprep.subr.bf16.mxu0 0
          %844 = vmatpush1.bf16.msra.mxu0 %v822
          %845 = vmatprep.subr.bf16.mxu0 0
          %846 = vmatpush1.bf16.msra.mxu0 %v821
          %847 = vmatprep.subr.bf16.mxu0 0
          %848 = vmatpush1.bf16.msra.mxu0 %v820
          %849 = vmatprep.subr.bf16.mxu0 0
          %850 = vmatpush1.bf16.msra.mxu0 %v819
          %851 = vmatprep.subr.bf16.mxu0 0
          %852 = vmatpush2.bf16.msra.mxu0 0
          %853 = vmatprep.subr.bf16.mxu0 0
          %854 = vmatpush2.bf16.msra.mxu0 0
          %855 = vmatprep.subr.bf16.mxu0 0
          %856 = vmatpush2.bf16.msra.mxu0 0
          %857 = vmatprep.subr.bf16.mxu0 0
          %858 = vmatpush2.bf16.msra.mxu0 0
          %859 = vmatprep.subr.bf16.mxu0 0
          %860 = vmatpush2.bf16.msra.mxu0 0
          %861 = vmatprep.subr.bf16.mxu0 0
          %862 = vmatpush2.bf16.msra.mxu0 0
          %863 = vmatprep.subr.bf16.mxu0 0
          %864 = vmatpush2.bf16.msra.mxu0 0
          %865 = vmatprep.subr.bf16.mxu0 0
          %866 = vmatpush2.bf16.msra.mxu0 0
          %867 = vmatprep.mubr.bf16.mxu0 0
          %868 = vmatmul.mubr.bf16.gmra.mxu0 %v763
          %v869 = vpop.f32.mrf.mxu0
          %v870 = vadd.f32 %v785, %v869
          %v871 = vpop.f32.mrf.mxu0
          %v872 = vpop.f32.mrf.mxu0
          %v873 = vpop.f32.mrf.mxu0
          %874 = vdwg.mxu0
          %875 = vst [vmem:[#allocation2] sm:$0xff] %v870
        $region112: #{tpu_custom_call.1} parent=79 // pred_fallthru
          _
        %v876 = vld [vmem:[#allocation2] sm:$0xff]
        %v877 = vpack.c.bf16 %v876, %v876
        %v878 = vld [vmem:[%s639] sm:$0xf]
        %v879 = vld [vmem:[%s639 + $0x4] sm:$0xf]
        %v880 = vld [vmem:[%s639 + $0x8] sm:$0xf]
        %v881 = vld [vmem:[%s639 + $0xc] sm:$0xf]
        %v882 = vld [vmem:[%s639 + $0x10] sm:$0xf]
        %v883 = vld [vmem:[%s639 + $0x14] sm:$0xf]
        %v884 = vld [vmem:[%s639 + $0x18] sm:$0xf]
        %v885 = vld [vmem:[%s639 + $0x1c] sm:$0xf]
        %v886 = vld [vmem:[%s639 + $0x20] sm:$0xf]
        %v887 = vld [vmem:[%s639 + $0x24] sm:$0xf]
        %v888 = vld [vmem:[%s639 + $0x28] sm:$0xf]
        %v889 = vld [vmem:[%s639 + $0x2c] sm:$0xf]
        %v890 = vld [vmem:[%s639 + $0x30] sm:$0xf]
        %v891 = vld [vmem:[%s639 + $0x34] sm:$0xf]
        %v892 = vld [vmem:[%s639 + $0x38] sm:$0xf]
        %v893 = vld [vmem:[%s639 + $0x3c] sm:$0xf]
        %v894 = vld [vmem:[%s737] sm:$0x1]
        %v896 = vlaneseq
        %v897 = vshrl.u32 %v896, 7
        %v898 = vsub.s32 0, %v897
        %v899 = vrot.slane %v894, %v898
        %v917 = vunpack.c.l.b16 %v878
        %v918 = vunpack.c.l.b16 %v879
        %v919 = vunpack.c.l.b16 %v880
        %v920 = vunpack.c.l.b16 %v881
        %v921 = vunpack.c.l.b16 %v882
        %v922 = vunpack.c.l.b16 %v883
        %v923 = vunpack.c.l.b16 %v884
        %v924 = vunpack.c.l.b16 %v885
        %v925 = vunpack.c.l.b16 %v886
        %v926 = vunpack.c.l.b16 %v887
        %v927 = vunpack.c.l.b16 %v888
        %v928 = vunpack.c.l.b16 %v889
        %v929 = vunpack.c.l.b16 %v890
        %v930 = vunpack.c.l.b16 %v891
        %v931 = vunpack.c.l.b16 %v892
        %v932 = vunpack.c.l.b16 %v893
        %v933 = vpack.c.b16 %v918, %v917
        %v934 = vpack.c.b16 %v920, %v919
        %v935 = vpack.c.b16 %v922, %v921
        %v936 = vpack.c.b16 %v924, %v923
        %v937 = vpack.c.b16 %v926, %v925
        %v938 = vpack.c.b16 %v928, %v927
        %v939 = vpack.c.b16 %v930, %v929
        %v940 = vpack.c.b16 %v932, %v931
        %949 = vmatprep.subr.bf16.mxu0 0
        %950 = vmatpush1.bf16.msra.mxu0 %v940
        %951 = vmatprep.subr.bf16.mxu0 0
        %952 = vmatpush1.bf16.msra.mxu0 %v939
        %953 = vmatprep.subr.bf16.mxu0 0
        %954 = vmatpush1.bf16.msra.mxu0 %v938
        %955 = vmatprep.subr.bf16.mxu0 0
        %956 = vmatpush1.bf16.msra.mxu0 %v937
        %957 = vmatprep.subr.bf16.mxu0 0
        %958 = vmatpush1.bf16.msra.mxu0 %v936
        %959 = vmatprep.subr.bf16.mxu0 0
        %960 = vmatpush1.bf16.msra.mxu0 %v935
        %961 = vmatprep.subr.bf16.mxu0 0
        %962 = vmatpush1.bf16.msra.mxu0 %v934
        %963 = vmatprep.subr.bf16.mxu0 0
        %964 = vmatpush1.bf16.msra.mxu0 %v933
        %965 = vmatprep.subr.bf16.mxu0 0
        %966 = vmatpush2.bf16.msra.mxu0 0
        %967 = vmatprep.subr.bf16.mxu0 0
        %968 = vmatpush2.bf16.msra.mxu0 0
        %969 = vmatprep.subr.bf16.mxu0 0
        %970 = vmatpush2.bf16.msra.mxu0 0
        %971 = vmatprep.subr.bf16.mxu0 0
        %972 = vmatpush2.bf16.msra.mxu0 0
        %973 = vmatprep.subr.bf16.mxu0 0
        %974 = vmatpush2.bf16.msra.mxu0 0
        %975 = vmatprep.subr.bf16.mxu0 0
        %976 = vmatpush2.bf16.msra.mxu0 0
        %977 = vmatprep.subr.bf16.mxu0 0
        %978 = vmatpush2.bf16.msra.mxu0 0
        %979 = vmatprep.subr.bf16.mxu0 0
        %980 = vmatpush2.bf16.msra.mxu0 0
        %981 = vmatprep.mubr.bf16.mxu0 0
        %982 = vmatmul.mubr.bf16.gmra.mxu0 %v877
        %v983 = vpop.f32.mrf.mxu0
        %v984 = vadd.f32 %v899, %v983
        %v985 = vpop.f32.mrf.mxu0
        %v986 = vpop.f32.mrf.mxu0
        %v987 = vpop.f32.mrf.mxu0
        %988 = vdwg.mxu0
        %v989 = vadd.f32 %v876, %v984
        %v990 = vld [vmem:[%s740] sm:$0x1]
        %v991 = vld [vmem:[%s743] sm:$0x1]
        %992 = vadd.xlane.f32.xlu0 %v989
        %v993 = vpop.xlane.xlu0 %992
        %v994 = vrcp.pop 128.0
        %v995 = vmul.f32 %v993, %v994
        %v996 = vsub.f32 %v989, %v995
        %v997 = vmul.f32 %v996, %v996
        %998 = vadd.xlane.f32.xlu0 %v997
        %v999 = vpop.xlane.xlu0 %998
        %v1000 = vmul.f32 %v999, %v994
        %v1001 = vadd.f32 %v1000, 1e-05
        %v1002 = vrsqrt.pop %v1001
        %v1003 = vmul.f32 %v996, %v1002
        %v1005 = vlaneseq
        %v1006 = vshrl.u32 %v1005, 7
        %v1007 = vsub.s32 0, %v1006
        %v1008 = vrot.slane %v990, %v1007
        %v1010 = vmul.f32 %v1003, %v1008
        %v1012 = vlaneseq
        %v1013 = vshrl.u32 %v1012, 7
        %v1014 = vsub.s32 0, %v1013
        %v1015 = vrot.slane %v991, %v1014
        %v1017 = vadd.f32 %v1010, %v1015
        %v1018 = vpack.c.bf16 %v1017, %v1017
        %v1019 = vld [vmem:[%s648] sm:$0xff]
        %v1020 = vld [vmem:[%s648 + $0x8] sm:$0xff]
        %v1021 = vld [vmem:[%s648 + $0x10] sm:$0xff]
        %v1022 = vld [vmem:[%s648 + $0x18] sm:$0xff]
        %v1023 = vld [vmem:[%s648 + $0x20] sm:$0xff]
        %v1024 = vld [vmem:[%s648 + $0x28] sm:$0xff]
        %v1025 = vld [vmem:[%s648 + $0x30] sm:$0xff]
        %v1026 = vld [vmem:[%s648 + $0x38] sm:$0xff]
        %v1027 = vld [vmem:[%s648 + $0x40] sm:$0xff]
        %v1028 = vld [vmem:[%s648 + $0x48] sm:$0xff]
        %v1029 = vld [vmem:[%s648 + $0x50] sm:$0xff]
        %v1030 = vld [vmem:[%s648 + $0x58] sm:$0xff]
        %v1031 = vld [vmem:[%s648 + $0x60] sm:$0xff]
        %v1032 = vld [vmem:[%s648 + $0x68] sm:$0xff]
        %v1033 = vld [vmem:[%s648 + $0x70] sm:$0xff]
        %v1034 = vld [vmem:[%s648 + $0x78] sm:$0xff]
        %v1035 = vld [vmem:[%s747] sm:$0x3]
        %v1037 = vlaneseq
        %v1038 = vshrl.u32 %v1037, 7
        %v1039 = vsub.s32 0, %v1038
        %v1040 = vrot.slane %v1035, %v1039
        %v1041 = vlaneseq
        %v1042 = vshrl.u32 %v1041, 7
        %v1043 = vsub.s32 1, %v1042
        %v1044 = vrot.slane %v1035, %v1043
        %v1063 = vunpack.c.l.b16 %v1019
        %v1064 = vunpack.c.h.b16 %v1019
        %v1065 = vunpack.c.l.b16 %v1020
        %v1066 = vunpack.c.h.b16 %v1020
        %v1067 = vunpack.c.l.b16 %v1021
        %v1068 = vunpack.c.h.b16 %v1021
        %v1069 = vunpack.c.l.b16 %v1022
        %v1070 = vunpack.c.h.b16 %v1022
        %v1071 = vunpack.c.l.b16 %v1023
        %v1072 = vunpack.c.h.b16 %v1023
        %v1073 = vunpack.c.l.b16 %v1024
        %v1074 = vunpack.c.h.b16 %v1024
        %v1075 = vunpack.c.l.b16 %v1025
        %v1076 = vunpack.c.h.b16 %v1025
        %v1077 = vunpack.c.l.b16 %v1026
        %v1078 = vunpack.c.h.b16 %v1026
        %v1079 = vunpack.c.l.b16 %v1027
        %v1080 = vunpack.c.h.b16 %v1027
        %v1081 = vunpack.c.l.b16 %v1028
        %v1082 = vunpack.c.h.b16 %v1028
        %v1083 = vunpack.c.l.b16 %v1029
        %v1084 = vunpack.c.h.b16 %v1029
        %v1085 = vunpack.c.l.b16 %v1030
        %v1086 = vunpack.c.h.b16 %v1030
        %v1087 = vunpack.c.l.b16 %v1031
        %v1088 = vunpack.c.h.b16 %v1031
        %v1089 = vunpack.c.l.b16 %v1032
        %v1090 = vunpack.c.h.b16 %v1032
        %v1091 = vunpack.c.l.b16 %v1033
        %v1092 = vunpack.c.h.b16 %v1033
        %v1093 = vunpack.c.l.b16 %v1034
        %v1094 = vunpack.c.h.b16 %v1034
        %v1095 = vpack.c.b16 %v1065, %v1063
        %v1096 = vpack.c.b16 %v1066, %v1064
        %v1097 = vpack.c.b16 %v1069, %v1067
        %v1098 = vpack.c.b16 %v1070, %v1068
        %v1099 = vpack.c.b16 %v1073, %v1071
        %v1100 = vpack.c.b16 %v1074, %v1072
        %v1101 = vpack.c.b16 %v1077, %v1075
        %v1102 = vpack.c.b16 %v1078, %v1076
        %v1103 = vpack.c.b16 %v1081, %v1079
        %v1104 = vpack.c.b16 %v1082, %v1080
        %v1105 = vpack.c.b16 %v1085, %v1083
        %v1106 = vpack.c.b16 %v1086, %v1084
        %v1107 = vpack.c.b16 %v1089, %v1087
        %v1108 = vpack.c.b16 %v1090, %v1088
        %v1109 = vpack.c.b16 %v1093, %v1091
        %v1110 = vpack.c.b16 %v1094, %v1092
        %1127 = vmatprep.subr.bf16.mxu0 %v1110
        %1128 = vmatpush1.bf16.msra.mxu0 %v1109
        %1129 = vmatprep.subr.bf16.mxu0 %v1108
        %1130 = vmatpush1.bf16.msra.mxu0 %v1107
        %1131 = vmatprep.subr.bf16.mxu0 %v1106
        %1132 = vmatpush1.bf16.msra.mxu0 %v1105
        %1133 = vmatprep.subr.bf16.mxu0 %v1104
        %1134 = vmatpush1.bf16.msra.mxu0 %v1103
        %1135 = vmatprep.subr.bf16.mxu0 %v1102
        %1136 = vmatpush1.bf16.msra.mxu0 %v1101
        %1137 = vmatprep.subr.bf16.mxu0 %v1100
        %1138 = vmatpush1.bf16.msra.mxu0 %v1099
        %1139 = vmatprep.subr.bf16.mxu0 %v1098
        %1140 = vmatpush1.bf16.msra.mxu0 %v1097
        %1141 = vmatprep.subr.bf16.mxu0 %v1096
        %1142 = vmatpush1.bf16.msra.mxu0 %v1095
        %1143 = vmatprep.subr.bf16.mxu0 0
        %1144 = vmatpush2.bf16.msra.mxu0 0
        %1145 = vmatprep.subr.bf16.mxu0 0
        %1146 = vmatpush2.bf16.msra.mxu0 0
        %1147 = vmatprep.subr.bf16.mxu0 0
        %1148 = vmatpush2.bf16.msra.mxu0 0
        %1149 = vmatprep.subr.bf16.mxu0 0
        %1150 = vmatpush2.bf16.msra.mxu0 0
        %1151 = vmatprep.subr.bf16.mxu0 0
        %1152 = vmatpush2.bf16.msra.mxu0 0
        %1153 = vmatprep.subr.bf16.mxu0 0
        %1154 = vmatpush2.bf16.msra.mxu0 0
        %1155 = vmatprep.subr.bf16.mxu0 0
        %1156 = vmatpush2.bf16.msra.mxu0 0
        %1157 = vmatprep.subr.bf16.mxu0 0
        %1158 = vmatpush2.bf16.msra.mxu0 0
        %1159 = vmatprep.mubr.bf16.mxu0 0
        %1160 = vmatmul.mubr.bf16.gmra.mxu0 %v1018
        %v1161 = vpop.f32.mrf.mxu0
        %v1162 = vadd.f32 %v1040, %v1161
        %v1163 = vpop.f32.mrf.mxu0
        %v1164 = vadd.f32 %v1044, %v1163
        %v1165 = vpop.f32.mrf.mxu0
        %v1166 = vpop.f32.mrf.mxu0
        %1167 = vdwg.mxu0
        %v1168 = vmax.f32 %v1162, 0.0
        %v1169 = vmax.f32 %v1164, 0.0
        %v1170 = vpack.c.bf16 %v1168, %v1168
        %v1171 = vpack.c.bf16 %v1169, %v1169
        %v1172 = vld [vmem:[%s657] sm:$0xf]
        %v1173 = vld [vmem:[%s657 + $0x4] sm:$0xf]
        %v1174 = vld [vmem:[%s657 + $0x8] sm:$0xf]
        %v1175 = vld [vmem:[%s657 + $0xc] sm:$0xf]
        %v1176 = vld [vmem:[%s657 + $0x10] sm:$0xf]
        %v1177 = vld [vmem:[%s657 + $0x14] sm:$0xf]
        %v1178 = vld [vmem:[%s657 + $0x18] sm:$0xf]
        %v1179 = vld [vmem:[%s657 + $0x1c] sm:$0xf]
        %v1180 = vld [vmem:[%s657 + $0x20] sm:$0xf]
        %v1181 = vld [vmem:[%s657 + $0x24] sm:$0xf]
        %v1182 = vld [vmem:[%s657 + $0x28] sm:$0xf]
        %v1183 = vld [vmem:[%s657 + $0x2c] sm:$0xf]
        %v1184 = vld [vmem:[%s657 + $0x30] sm:$0xf]
        %v1185 = vld [vmem:[%s657 + $0x34] sm:$0xf]
        %v1186 = vld [vmem:[%s657 + $0x38] sm:$0xf]
        %v1187 = vld [vmem:[%s657 + $0x3c] sm:$0xf]
        %v1188 = vld [vmem:[%s657 + $0x40] sm:$0xf]
        %v1189 = vld [vmem:[%s657 + $0x44] sm:$0xf]
        %v1190 = vld [vmem:[%s657 + $0x48] sm:$0xf]
        %v1191 = vld [vmem:[%s657 + $0x4c] sm:$0xf]
        %v1192 = vld [vmem:[%s657 + $0x50] sm:$0xf]
        %v1193 = vld [vmem:[%s657 + $0x54] sm:$0xf]
        %v1194 = vld [vmem:[%s657 + $0x58] sm:$0xf]
        %v1195 = vld [vmem:[%s657 + $0x5c] sm:$0xf]
        %v1196 = vld [vmem:[%s657 + $0x60] sm:$0xf]
        %v1197 = vld [vmem:[%s657 + $0x64] sm:$0xf]
        %v1198 = vld [vmem:[%s657 + $0x68] sm:$0xf]
        %v1199 = vld [vmem:[%s657 + $0x6c] sm:$0xf]
        %v1200 = vld [vmem:[%s657 + $0x70] sm:$0xf]
        %v1201 = vld [vmem:[%s657 + $0x74] sm:$0xf]
        %v1202 = vld [vmem:[%s657 + $0x78] sm:$0xf]
        %v1203 = vld [vmem:[%s657 + $0x7c] sm:$0xf]
        %v1204 = vld [vmem:[%s750] sm:$0x1]
        %v1206 = vlaneseq
        %v1207 = vshrl.u32 %v1206, 7
        %v1208 = vsub.s32 0, %v1207
        %v1209 = vrot.slane %v1204, %v1208
        %v1243 = vunpack.c.l.b16 %v1172
        %v1244 = vunpack.c.l.b16 %v1173
        %v1245 = vunpack.c.l.b16 %v1174
        %v1246 = vunpack.c.l.b16 %v1175
        %v1247 = vunpack.c.l.b16 %v1176
        %v1248 = vunpack.c.l.b16 %v1177
        %v1249 = vunpack.c.l.b16 %v1178
        %v1250 = vunpack.c.l.b16 %v1179
        %v1251 = vunpack.c.l.b16 %v1180
        %v1252 = vunpack.c.l.b16 %v1181
        %v1253 = vunpack.c.l.b16 %v1182
        %v1254 = vunpack.c.l.b16 %v1183
        %v1255 = vunpack.c.l.b16 %v1184
        %v1256 = vunpack.c.l.b16 %v1185
        %v1257 = vunpack.c.l.b16 %v1186
        %v1258 = vunpack.c.l.b16 %v1187
        %v1259 = vunpack.c.l.b16 %v1188
        %v1260 = vunpack.c.l.b16 %v1189
        %v1261 = vunpack.c.l.b16 %v1190
        %v1262 = vunpack.c.l.b16 %v1191
        %v1263 = vunpack.c.l.b16 %v1192
        %v1264 = vunpack.c.l.b16 %v1193
        %v1265 = vunpack.c.l.b16 %v1194
        %v1266 = vunpack.c.l.b16 %v1195
        %v1267 = vunpack.c.l.b16 %v1196
        %v1268 = vunpack.c.l.b16 %v1197
        %v1269 = vunpack.c.l.b16 %v1198
        %v1270 = vunpack.c.l.b16 %v1199
        %v1271 = vunpack.c.l.b16 %v1200
        %v1272 = vunpack.c.l.b16 %v1201
        %v1273 = vunpack.c.l.b16 %v1202
        %v1274 = vunpack.c.l.b16 %v1203
        %v1275 = vpack.c.b16 %v1244, %v1243
        %v1276 = vpack.c.b16 %v1246, %v1245
        %v1277 = vpack.c.b16 %v1248, %v1247
        %v1278 = vpack.c.b16 %v1250, %v1249
        %v1279 = vpack.c.b16 %v1252, %v1251
        %v1280 = vpack.c.b16 %v1254, %v1253
        %v1281 = vpack.c.b16 %v1256, %v1255
        %v1282 = vpack.c.b16 %v1258, %v1257
        %v1283 = vpack.c.b16 %v1260, %v1259
        %v1284 = vpack.c.b16 %v1262, %v1261
        %v1285 = vpack.c.b16 %v1264, %v1263
        %v1286 = vpack.c.b16 %v1266, %v1265
        %v1287 = vpack.c.b16 %v1268, %v1267
        %v1288 = vpack.c.b16 %v1270, %v1269
        %v1289 = vpack.c.b16 %v1272, %v1271
        %v1290 = vpack.c.b16 %v1274, %v1273
        %1307 = vmatprep.subr.bf16.mxu0 0
        %1308 = vmatpush1.bf16.msra.mxu0 %v1282
        %1309 = vmatprep.subr.bf16.mxu0 0
        %1310 = vmatpush1.bf16.msra.mxu0 %v1281
        %1311 = vmatprep.subr.bf16.mxu0 0
        %1312 = vmatpush1.bf16.msra.mxu0 %v1280
        %1313 = vmatprep.subr.bf16.mxu0 0
        %1314 = vmatpush1.bf16.msra.mxu0 %v1279
        %1315 = vmatprep.subr.bf16.mxu0 0
        %1316 = vmatpush1.bf16.msra.mxu0 %v1278
        %1317 = vmatprep.subr.bf16.mxu0 0
        %1318 = vmatpush1.bf16.msra.mxu0 %v1277
        %1319 = vmatprep.subr.bf16.mxu0 0
        %1320 = vmatpush1.bf16.msra.mxu0 %v1276
        %1321 = vmatprep.subr.bf16.mxu0 0
        %1322 = vmatpush1.bf16.msra.mxu0 %v1275
        %1323 = vmatprep.subr.bf16.mxu0 0
        %1324 = vmatpush2.bf16.msra.mxu0 %v1290
        %1325 = vmatprep.subr.bf16.mxu0 0
        %1326 = vmatpush2.bf16.msra.mxu0 %v1289
        %1327 = vmatprep.subr.bf16.mxu0 0
        %1328 = vmatpush2.bf16.msra.mxu0 %v1288
        %1329 = vmatprep.subr.bf16.mxu0 0
        %1330 = vmatpush2.bf16.msra.mxu0 %v1287
        %1331 = vmatprep.subr.bf16.mxu0 0
        %1332 = vmatpush2.bf16.msra.mxu0 %v1286
        %1333 = vmatprep.subr.bf16.mxu0 0
        %1334 = vmatpush2.bf16.msra.mxu0 %v1285
        %1335 = vmatprep.subr.bf16.mxu0 0
        %1336 = vmatpush2.bf16.msra.mxu0 %v1284
        %1337 = vmatprep.subr.bf16.mxu0 0
        %1338 = vmatpush2.bf16.msra.mxu0 %v1283
        %1339 = vmatprep.mubr.bf16.mxu0 %v1171
        %1340 = vmatmul.mubr.bf16.gmra.mxu0 %v1170
        %v1341 = vpop.f32.mrf.mxu0
        %v1342 = vadd.f32 %v1209, %v1341
        %v1343 = vpop.f32.mrf.mxu0
        %v1344 = vpop.f32.mrf.mxu0
        %v1345 = vpop.f32.mrf.mxu0
        %1346 = vdwg.mxu0
        %v1347 = vadd.f32 %v1017, %v1342
        %v1348 = vld [vmem:[%s753] sm:$0x1]
        %v1349 = vld [vmem:[%s756] sm:$0x1]
        %1350 = vadd.xlane.f32.xlu0 %v1347
        %v1351 = vpop.xlane.xlu0 %1350
        %v1352 = vmul.f32 %v1351, %v994
        %v1353 = vsub.f32 %v1347, %v1352
        %v1354 = vmul.f32 %v1353, %v1353
        %1355 = vadd.xlane.f32.xlu0 %v1354
        %v1356 = vpop.xlane.xlu0 %1355
        %v1357 = vmul.f32 %v1356, %v994
        %v1358 = vadd.f32 %v1357, 1e-05
        %v1359 = vrsqrt.pop %v1358
        %v1360 = vmul.f32 %v1353, %v1359
        %v1362 = vlaneseq
        %v1363 = vshrl.u32 %v1362, 7
        %v1364 = vsub.s32 0, %v1363
        %v1365 = vrot.slane %v1348, %v1364
        %v1367 = vmul.f32 %v1360, %v1365
        %v1369 = vlaneseq
        %v1370 = vshrl.u32 %v1369, 7
        %v1371 = vsub.s32 0, %v1370
        %v1372 = vrot.slane %v1349, %v1371
        %v1374 = vadd.f32 %v1367, %v1372
        %1375 = vst [vmem:[#allocation2] sm:$0xff] %v1374
        %p1376 = scmp.eq.s32.totalorder %s40, 1
        // Predicated region
        $region113: #{tpu_custom_call.1} parent=79 // pred_check
          %p1377 = pneg %p1376
        $region114: #{tpu_custom_call.1} parent=79 // pred_check_branch
          %1379 = sbr.rel (%p1377) target = $region116
        $region115: #{tpu_custom_call.1} parent=79 // pred_region
          %v1380 = vpack.c.bf16 %v1374, %v1374
          %v1381 = vld [vmem:[#allocation14] sm:$0xf]
          %v1382 = vld [vmem:[#allocation14 + $0x4] sm:$0xf]
          %v1383 = vld [vmem:[#allocation14 + $0x8] sm:$0xf]
          %v1384 = vld [vmem:[#allocation14 + $0xc] sm:$0xf]
          %v1385 = vld [vmem:[#allocation14 + $0x10] sm:$0xf]
          %v1386 = vld [vmem:[#allocation14 + $0x14] sm:$0xf]
          %v1387 = vld [vmem:[#allocation14 + $0x18] sm:$0xf]
          %v1388 = vld [vmem:[#allocation14 + $0x1c] sm:$0xf]
          %v1389 = vld [vmem:[#allocation14 + $0x20] sm:$0xf]
          %v1390 = vld [vmem:[#allocation14 + $0x24] sm:$0xf]
          %v1391 = vld [vmem:[#allocation14 + $0x28] sm:$0xf]
          %v1392 = vld [vmem:[#allocation14 + $0x2c] sm:$0xf]
          %v1393 = vld [vmem:[#allocation14 + $0x30] sm:$0xf]
          %v1394 = vld [vmem:[#allocation14 + $0x34] sm:$0xf]
          %v1395 = vld [vmem:[#allocation14 + $0x38] sm:$0xf]
          %v1396 = vld [vmem:[#allocation14 + $0x3c] sm:$0xf]
          %v1397 = vld [vmem:[%s14] sm:$0x1]
          %v1399 = vlaneseq
          %v1400 = vshrl.u32 %v1399, 7
          %v1401 = vsub.s32 0, %v1400
          %v1402 = vrot.slane %v1397, %v1401
          %v1420 = vunpack.c.l.b16 %v1381
          %v1421 = vunpack.c.l.b16 %v1382
          %v1422 = vunpack.c.l.b16 %v1383
          %v1423 = vunpack.c.l.b16 %v1384
          %v1424 = vunpack.c.l.b16 %v1385
          %v1425 = vunpack.c.l.b16 %v1386
          %v1426 = vunpack.c.l.b16 %v1387
          %v1427 = vunpack.c.l.b16 %v1388
          %v1428 = vunpack.c.l.b16 %v1389
          %v1429 = vunpack.c.l.b16 %v1390
          %v1430 = vunpack.c.l.b16 %v1391
          %v1431 = vunpack.c.l.b16 %v1392
          %v1432 = vunpack.c.l.b16 %v1393
          %v1433 = vunpack.c.l.b16 %v1394
          %v1434 = vunpack.c.l.b16 %v1395
          %v1435 = vunpack.c.l.b16 %v1396
          %v1436 = vpack.c.b16 %v1421, %v1420
          %v1437 = vpack.c.b16 %v1423, %v1422
          %v1438 = vpack.c.b16 %v1425, %v1424
          %v1439 = vpack.c.b16 %v1427, %v1426
          %v1440 = vpack.c.b16 %v1429, %v1428
          %v1441 = vpack.c.b16 %v1431, %v1430
          %v1442 = vpack.c.b16 %v1433, %v1432
          %v1443 = vpack.c.b16 %v1435, %v1434
          %1452 = vmatprep.subr.bf16.mxu0 0
          %1453 = vmatpush1.bf16.msra.mxu0 %v1443
          %1454 = vmatprep.subr.bf16.mxu0 0
          %1455 = vmatpush1.bf16.msra.mxu0 %v1442
          %1456 = vmatprep.subr.bf16.mxu0 0
          %1457 = vmatpush1.bf16.msra.mxu0 %v1441
          %1458 = vmatprep.subr.bf16.mxu0 0
          %1459 = vmatpush1.bf16.msra.mxu0 %v1440
          %1460 = vmatprep.subr.bf16.mxu0 0
          %1461 = vmatpush1.bf16.msra.mxu0 %v1439
          %1462 = vmatprep.subr.bf16.mxu0 0
          %1463 = vmatpush1.bf16.msra.mxu0 %v1438
          %1464 = vmatprep.subr.bf16.mxu0 0
          %1465 = vmatpush1.bf16.msra.mxu0 %v1437
          %1466 = vmatprep.subr.bf16.mxu0 0
          %1467 = vmatpush1.bf16.msra.mxu0 %v1436
          %1468 = vmatprep.subr.bf16.mxu0 0
          %1469 = vmatpush2.bf16.msra.mxu0 0
          %1470 = vmatprep.subr.bf16.mxu0 0
          %1471 = vmatpush2.bf16.msra.mxu0 0
          %1472 = vmatprep.subr.bf16.mxu0 0
          %1473 = vmatpush2.bf16.msra.mxu0 0
          %1474 = vmatprep.subr.bf16.mxu0 0
          %1475 = vmatpush2.bf16.msra.mxu0 0
          %1476 = vmatprep.subr.bf16.mxu0 0
          %1477 = vmatpush2.bf16.msra.mxu0 0
          %1478 = vmatprep.subr.bf16.mxu0 0
          %1479 = vmatpush2.bf16.msra.mxu0 0
          %1480 = vmatprep.subr.bf16.mxu0 0
          %1481 = vmatpush2.bf16.msra.mxu0 0
          %1482 = vmatprep.subr.bf16.mxu0 0
          %1483 = vmatpush2.bf16.msra.mxu0 0
          %1484 = vmatprep.mubr.bf16.mxu0 0
          %1485 = vmatmul.mubr.bf16.gmra.mxu0 %v1380
          %v1486 = vpop.f32.mrf.mxu0
          %v1487 = vadd.f32 %v1402, %v1486
          %v1488 = vpop.f32.mrf.mxu0
          %v1489 = vpop.f32.mrf.mxu0
          %v1490 = vpop.f32.mrf.mxu0
          %1491 = vdwg.mxu0
          %1492 = vst [vmem:[#allocation15] sm:$0xff] %v1487
        $region116: #{tpu_custom_call.1} parent=79 // pred_fallthru
          _
        // Predicated region
        $region117: #{tpu_custom_call.1} parent=79 // pred_check
          %p1493 = pneg %p435
        $region118: #{tpu_custom_call.1} parent=79 // pred_check_branch
          %1495 = sbr.rel (%p1493) target = $region120
        $region119: #{tpu_custom_call.1} parent=79 // pred_region
          %s1497 = ssub.s32 128, 128
          %1498 = vsyncadd [#allocation5], %s1497
          %s1499 = smul.addr %s39, 128
          %s1500 = scalar_lea.hbm %s15, %s1499
          %s1502 = sshll.u32 [#allocation15], 4
          %s1503 = int_to_ptr.vmem [resolvable:$true] %s1502
          %1505 = dma.vmem_to_hbm [thread:$0]  %s1503, 128, %s1500, [#allocation5]
        $region120: #{tpu_custom_call.1} parent=79 // pred_fallthru
          _
        // Predicated region
        $region121: #{tpu_custom_call.1} parent=79 // pred_check
          %p1506 = pneg %p435
        $region122: #{tpu_custom_call.1} parent=79 // pred_check_branch
          %1508 = sbr.rel (%p1506) target = $region124
        $region123: #{tpu_custom_call.1} parent=79 // pred_region
          %1509 = dma.done [#allocation5], 128
        $region124: #{tpu_custom_call.1} parent=79 // pred_fallthru
          _
      $region80: #{tpu_custom_call.1} parent=5 // pred_fallthru
        _
      %p1510 = scmp.le.s32.totalorder 2, %s30
      // Predicated region
      $region125: #{tpu_custom_call.1} parent=5 // pred_check
        %p1511 = pneg %p1510
      $region126: #{tpu_custom_call.1} parent=5 // pred_check_branch
        %1513 = sbr.rel (%p1511) target = $region128
      $region127: #{tpu_custom_call.1} parent=5 // pred_region
        %s1514 = ssub.s32 %s30, 2
      $region128: #{tpu_custom_call.1} parent=5 // pred_fallthru
        _
    $region6: #{tpu_custom_call.1} parent=1 // loop_footer
      %s34 = sadd.s32 1, %s30
    $region7: #{tpu_custom_call.1} parent=1 // loop_footer_branch
      %29 = sbr.rel target = $region3
    $region8: #{tpu_custom_call.1} parent=1 // loop_exit
      _
    %1515 = vsyncpa [#allocation4], 1
    %s1516 = scalar_lea.sflag [#allocation4], 1
    %1517 = vsyncpa %s1516, 1
    %1518 = vsyncpa [#allocation7], 1
    %1519 = vsyncpa [#allocation10], 1
    %s1520 = scalar_lea.sflag [#allocation10], 1
    %1521 = vsyncpa %s1520, 1
    %1522 = vsyncpa [#allocation13], 1
    %s1523 = scalar_lea.sflag [#allocation13], 1
    %1524 = vsyncpa %s1523, 1
    %1525 = vsyncpa [#allocation5], 1
    %s1526 = scalar_lea.sflag [#allocation5], 1
    %1527 = vsyncpa %s1526, 1

</llo_original>
